<compile_context>
chip_gen: v7x
topology: tpu7x:2x2x1
jax: 0.10.0
libtpu: 0.0.40
codegen_flags: <defaults>
</compile_context>

<pallas_src>
import functools
import math

import jax
import jax.numpy as jnp
from jax import lax
from jax.experimental import pallas as pl
from jax.experimental.pallas import tpu as pltpu

KSIZE = 31      # Conv1d kernel size
PAD = 15        # Conv1d padding (stride 1 -> "same" length)
BN_EPS = 1e-5
VMEM_LIMIT = 32 * 1024 * 1024   # safe on v5e (128M phys), v6e (128M), v7x (64M)


# ----------------------------------------------------------------------------
# Kernel 1 (BN path): conv (in-VMEM im2col + one MXU dot) + bias
#                     + per-(batch, channel) partial sum / sum-of-squares.
# ----------------------------------------------------------------------------
def _conv_stats_kernel(x_ref, w_ref, b_ref, y_ref, sum_ref, sq_ref, cols_ref,
                       *, valid_len):
    # x_ref    : (1, 1, C_in_p, tile_l + 2*PAD)  mxu dtype (halo'd input tile)
    # w_ref    : (C_out, K*C_in_p)               mxu dtype
    # b_ref    : (C_out, 1)                      f32
    # y_ref    : (1, C_out, tile_l)              bf16 (conv+bias, pre-BN)
    # sum_ref  : (1, C_out, 1) f32  per-batch partial sums (accumulate over t)
    # sq_ref   : (1, C_out, 1) f32
    # cols_ref : (K*C_in_p, tile_l) VMEM scratch -- in-kernel im2col block
    t = pl.program_id(1)
    cin_p = x_ref.shape[2]
    tile_l = y_ref.shape[2]

    # Build the im2col block in VMEM (31 shifted static slices of the halo'd
    # tile); the HBM cost is only the ~1.06x halo tile, not 31x.
    for k in range(KSIZE):
        cols_ref[k * cin_p:(k + 1) * cin_p, :] = x_ref[0, 0, :, pl.ds(k, tile_l)]

    y = jnp.dot(w_ref[...], cols_ref[...], preferred_element_type=jnp.float32)
    y = y + b_ref[...]                       # (C_out, 1) broadcasts over lanes
    y_ref[0] = y.astype(y_ref.dtype)         # bf16 intermediate for kernel 2

    @pl.when(t == 0)                         # new batch element -> reset stats
    def _():
        sum_ref[...] = jnp.zeros_like(sum_ref)
        sq_ref[...] = jnp.zeros_like(sq_ref)

    if valid_len is not None:
        # L was padded up to L_pad: padded columns carry bias/garbage and must
        # not contribute to the BatchNorm batch statistics.
        col = t * tile_l + lax.broadcasted_iota(jnp.int32, (1, tile_l), 1)
        y = jnp.where(col < valid_len, y, 0.0)
    sum_ref[0] += jnp.sum(y, axis=1, keepdims=True)
    sq_ref[0] += jnp.sum(y * y, axis=1, keepdims=True)


# ----------------------------------------------------------------------------
# Kernel 2 (BN path): fused BatchNorm affine + ReLU.
# ----------------------------------------------------------------------------
def _bn_relu_kernel(y_ref, scale_ref, shift_ref, o_ref):
    y = y_ref[0].astype(jnp.float32)
    o_ref[0] = jnp.maximum(y * scale_ref[...] + shift_ref[...], 0.0
                           ).astype(o_ref.dtype)


# ----------------------------------------------------------------------------
# No-BatchNorm path: conv + bias + ReLU in one pass.
# ----------------------------------------------------------------------------
def _conv_relu_kernel(x_ref, w_ref, b_ref, o_ref, cols_ref):
    cin_p = x_ref.shape[2]
    tile_l = o_ref.shape[2]
    for k in range(KSIZE):
        cols_ref[k * cin_p:(k + 1) * cin_p, :] = x_ref[0, 0, :, pl.ds(k, tile_l)]
    y = jnp.dot(w_ref[...], cols_ref[...], preferred_element_type=jnp.float32)
    o_ref[0] = jnp.maximum(y + b_ref[...], 0.0).astype(o_ref.dtype)


def _pick_tile(length, cin_p, c_out, mxu_bytes, budget_bytes):
    """Largest lane tile (multiple of 128) whose VMEM footprint stays within
    budget_bytes (halo double-buffer + cols scratch + output double-buffer +
    f32 accumulator), capped at 16384 and at ceil(length/128)*128."""
    l128 = -(-length // 128) * 128
    per_lane = (2 * cin_p * mxu_bytes        # halo input, double-buffered
                + KSIZE * cin_p * mxu_bytes  # cols scratch
                + 2 * c_out * 2              # bf16 y out, double-buffered
                + 2 * c_out * 4              # f32 out path headroom
                + 2 * c_out * 4)             # in-kernel f32 accumulator/temps
    tile = max(128, (budget_bytes // per_lane) // 128 * 128)
    return int(min(tile, l128, 16384))


# ----------------------------------------------------------------------------
# Module forward: Conv1d(k=31, s=1, p=15) -> BatchNorm1d(train-mode) -> ReLU
# ----------------------------------------------------------------------------
def model_conv1_forward(x, conv_w, conv_b, bn_gamma=None, bn_beta=None,
                        is_batchnorm=True, mxu_dtype=jnp.bfloat16,
                        vmem_tile_budget=8 << 20):
    N, C_in, L = x.shape
    C_out = conv_w.shape[0]
    cin_p = -(-C_in // 8) * 8                 # sublane-align the channel dim
    mxu_bytes = jnp.dtype(mxu_dtype).itemsize

    tile_l = _pick_tile(L, cin_p, C_out, mxu_bytes, vmem_tile_budget)
    n_t = -(-L // tile_l)
    L_pad = n_t * tile_l
    tile_hl = tile_l + 2 * PAD

    # Cheap wrapper-side prep (cast to mxu dtype FIRST so all XLA intermediates
    # are half-size): zero-pad channels to cin_p, length by PAD/PAD + tail,
    # then slice n_t halo'd tiles.  Overlap is only 2*PAD elements per tile.
    x_m = x.astype(mxu_dtype)
    x_p = jnp.pad(x_m, ((0, 0), (0, cin_p - C_in), (PAD, PAD + L_pad - L)))
    halo = jnp.stack([x_p[:, :, t * tile_l: t * tile_l + tile_hl]
                      for t in range(n_t)], axis=1)   # (N, n_t, cin_p, tile_hl)

    # w_flat[co, k*cin_p + ci] = conv_w[co, ci, k] (zero in padded channels).
    w_flat = jnp.pad(jnp.transpose(conv_w, (0, 2, 1)),
                     ((0, 0), (0, 0), (0, cin_p - C_in)))
    w_flat = w_flat.reshape(C_out, KSIZE * cin_p).astype(mxu_dtype)
    bias = conv_b.reshape(C_out, 1).astype(jnp.float32)

    grid = (N, n_t)
    halo_spec = pl.BlockSpec((1, 1, cin_p, tile_hl), lambda n, t: (n, t, 0, 0))
    w_spec = pl.BlockSpec((C_out, KSIZE * cin_p), lambda n, t: (0, 0))
    vec_spec = pl.BlockSpec((C_out, 1), lambda n, t: (0, 0))
    ytile_spec = pl.BlockSpec((1, C_out, tile_l), lambda n, t: (n, 0, t))
    stat_spec = pl.BlockSpec((1, C_out, 1), lambda n, t: (n, 0, 0))
    cols_scratch = pltpu.VMEM((KSIZE * cin_p, tile_l), mxu_dtype)

    if is_batchnorm:
        y_dtype = jnp.bfloat16 if mxu_dtype == jnp.bfloat16 else jnp.float32
        kern = functools.partial(_conv_stats_kernel,
                                 valid_len=L if L_pad > L else None)
        y_mid, psum, psq = pl.pallas_call(
            kern,
            out_shape=(jax.ShapeDtypeStruct((N, C_out, L_pad), y_dtype),
                       jax.ShapeDtypeStruct((N, C_out, 1), jnp.float32),
                       jax.ShapeDtypeStruct((N, C_out, 1), jnp.float32)),
            grid=grid,
            in_specs=[halo_spec, w_spec, vec_spec],
            out_specs=(ytile_spec, stat_spec, stat_spec),
            scratch_shapes=[cols_scratch],
            compiler_params=pltpu.CompilerParams(
                dimension_semantics=("parallel", "arbitrary"),
                vmem_limit_bytes=VMEM_LIMIT),
        )(halo, w_flat, bias)

        # Tiny XLA finalize on (C_out,) vectors: combine per-batch partials.
        # Single-pass E[y^2]-E[y]^2 in f32; fine at these activation scales.
        cnt = float(N * L)
        s = jnp.sum(psum, axis=0)
        sq = jnp.sum(psq, axis=0)
        mean = s / cnt
        var = jnp.maximum(sq / cnt - mean * mean, 0.0)   # biased (train mode)
        scale = bn_gamma.reshape(C_out, 1) / jnp.sqrt(var + BN_EPS)
        shift = bn_beta.reshape(C_out, 1) - mean * scale

        out_pad = pl.pallas_call(
            _bn_relu_kernel,
            out_shape=jax.ShapeDtypeStruct((N, C_out, L_pad), jnp.float32),
            grid=grid,
            in_specs=[ytile_spec, vec_spec, vec_spec],
            out_specs=ytile_spec,
            compiler_params=pltpu.CompilerParams(
                dimension_semantics=("parallel", "parallel"),
                vmem_limit_bytes=VMEM_LIMIT),
        )(y_mid, scale, shift)
    else:
        out_pad = pl.pallas_call(
            _conv_relu_kernel,
            out_shape=jax.ShapeDtypeStruct((N, C_out, L_pad), jnp.float32),
            grid=grid,
            in_specs=[halo_spec, w_spec, vec_spec],
            out_specs=ytile_spec,
            scratch_shapes=[cols_scratch],
            compiler_params=pltpu.CompilerParams(
                dimension_semantics=("parallel", "parallel"),
                vmem_limit_bytes=VMEM_LIMIT),
        )(halo, w_flat, bias)

    # Output is already (N, C_out, L_pad); just drop the length padding.
    return out_pad[:, :, :L] if L_pad > L else out_pad


# ----------------------------------------------------------------------------
# Pure-JAX reference (internal sanity check)
# ----------------------------------------------------------------------------
def _reference(x, conv_w, conv_b, bn_gamma, bn_beta, is_batchnorm):
    y = lax.conv_general_dilated(
        x, conv_w, window_strides=(1,), padding=[(PAD, PAD)],
        dimension_numbers=("NCH", "OIH", "NCH"))
    y = y + conv_b[None, :, None]
    if is_batchnorm:
        mean = jnp.mean(y, axis=(0, 2), keepdims=True)
        var = jnp.mean((y - mean) ** 2, axis=(0, 2), keepdims=True)
        y = (y - mean) / jnp.sqrt(var + BN_EPS)
        y = y * bn_gamma[None, :, None] + bn_beta[None, :, None]
    return jnp.maximum(y, 0.0)


if __name__ == "__main__":
    key = jax.random.PRNGKey(0)
    k_x, k_w, k_b = jax.random.split(key, 3)

    N, C_in, C_out, L = 2, 4, 8, 64

    x = jax.random.normal(k_x, (N, C_in, L), jnp.float32)
    fan_in = C_in * KSIZE
    bound = 1.0 / math.sqrt(fan_in)
    conv_w = jax.random.uniform(k_w, (C_out, C_in, KSIZE), jnp.float32,
                                minval=-bound, maxval=bound)
    conv_b = jax.random.uniform(k_b, (C_out,), jnp.float32,
                                minval=-bound, maxval=bound)
    bn_gamma = jnp.ones((C_out,), jnp.float32)   # BatchNorm1d default init
    bn_beta = jnp.zeros((C_out,), jnp.float32)

    fwd_bn = jax.jit(functools.partial(model_conv1_forward, is_batchnorm=True))
    fwd_nobn = jax.jit(functools.partial(model_conv1_forward,
                                         is_batchnorm=False))

    out_bn = jax.block_until_ready(fwd_bn(x, conv_w, conv_b, bn_gamma, bn_beta))
    out_nb = jax.block_until_ready(fwd_nobn(x, conv_w, conv_b,
                                            bn_gamma, bn_beta))

    # Compare against the reference evaluated on bf16-rounded inputs (the MXU
    # operands), so only accumulation-order / bf16-intermediate error remains.
    x_r = x.astype(jnp.bfloat16).astype(jnp.float32)
    w_r = conv_w.astype(jnp.bfloat16).astype(jnp.float32)
    ref_bn = _reference(x_r, w_r, conv_b, bn_gamma, bn_beta, True)
    ref_nb = _reference(x_r, w_r, conv_b, bn_gamma, bn_beta, False)

    assert out_bn.shape == (N, C_out, L)
    assert out_nb.shape == (N, C_out, L)
    assert jnp.allclose(out_bn, ref_bn, atol=2e-2, rtol=2e-2)
    assert jnp.allclose(out_nb, ref_nb, atol=1e-2, rtol=1e-2)

    print("KERNEL_OK")
</pallas_src>

<mosaic_0001>
module attributes {stable_mosaic.version = 11 : i64} {
  func.func @_bn_relu_kernel(%arg0: i32, %arg1: i32, %arg2: memref<1x8x128xbf16, #tpu.memory_space<vmem>>, %arg3: memref<8x1xf32, #tpu.memory_space<vmem>>, %arg4: memref<8x1xf32, #tpu.memory_space<vmem>>, %arg5: memref<1x8x128xf32, #tpu.memory_space<vmem>>) attributes {dimension_semantics = [#tpu.dimension_semantics<parallel>, #tpu.dimension_semantics<parallel>], iteration_bounds = array<i64: 2, 1>, scalar_prefetch = 0 : i64, scratch_operands = 0 : i64, tpu.core_type = #tpu.core_type<tc>, window_params = [{transform_indices = @transform_0, window_bounds = array<i64: 1, 8, 128>}, {pipeline_mode = #tpu.pipeline_mode<synchronous>, transform_indices = @transform_1, window_bounds = array<i64: 8, 1>}, {pipeline_mode = #tpu.pipeline_mode<synchronous>, transform_indices = @transform_2, window_bounds = array<i64: 8, 1>}, {transform_indices = @transform_3, window_bounds = array<i64: 1, 8, 128>}]} {
    %c0 = arith.constant 0 : index
    %c0_0 = arith.constant 0 : index
    %c0_1 = arith.constant 0 : index
    %0 = vector.load %arg2[%c0, %c0_0, %c0_1] : memref<1x8x128xbf16, #tpu.memory_space<vmem>>, vector<1x8x128xbf16>
    %1 = vector.shape_cast %0 : vector<1x8x128xbf16> to vector<8x128xbf16>
    %2 = arith.extf %1 : vector<8x128xbf16> to vector<8x128xf32>
    %c0_2 = arith.constant 0 : index
    %c0_3 = arith.constant 0 : index
    %3 = vector.load %arg3[%c0_2, %c0_3] : memref<8x1xf32, #tpu.memory_space<vmem>>, vector<8x1xf32>
    %4 = vector.broadcast %3 : vector<8x1xf32> to vector<8x128xf32>
    %5 = arith.mulf %2, %4 : vector<8x128xf32>
    %c0_4 = arith.constant 0 : index
    %c0_5 = arith.constant 0 : index
    %6 = vector.load %arg4[%c0_4, %c0_5] : memref<8x1xf32, #tpu.memory_space<vmem>>, vector<8x1xf32>
    %7 = vector.broadcast %6 : vector<8x1xf32> to vector<8x128xf32>
    %8 = arith.addf %5, %7 : vector<8x128xf32>
    %cst = arith.constant 0.000000e+00 : f32
    %9 = vector.broadcast %cst : f32 to vector<8x128xf32>
    %10 = arith.maximumf %8, %9 : vector<8x128xf32>
    %c0_6 = arith.constant 0 : index
    %c0_7 = arith.constant 0 : index
    %c0_8 = arith.constant 0 : index
    %11 = vector.load %arg5[%c0_6, %c0_7, %c0_8] : memref<1x8x128xf32, #tpu.memory_space<vmem>>, vector<1x8x128xf32>
    %12 = vector.shape_cast %11 : vector<1x8x128xf32> to vector<8x128xf32>
    %13 = vector.shape_cast %10 : vector<8x128xf32> to vector<1x8x128xf32>
    tpu.vector_store %arg5[%c0_6, %c0_7, %c0_8], %13 {strides = array<i32>} : memref<1x8x128xf32, #tpu.memory_space<vmem>>, vector<1x8x128xf32>,
    return
  }
  func.func @transform_0(%arg0: i32, %arg1: i32) -> (i32, i32, i32) {
    %c0_i32 = arith.constant 0 : i32
    %c0_i32_0 = arith.constant 0 : i32
    return %arg0, %c0_i32, %arg1 : i32, i32, i32
  }
  func.func @transform_1(%arg0: i32, %arg1: i32) -> (i32, i32) {
    %c0_i32 = arith.constant 0 : i32
    %c0_i32_0 = arith.constant 0 : i32
    %c0_i32_1 = arith.constant 0 : i32
    return %c0_i32, %c0_i32_0 : i32, i32
  }
  func.func @transform_2(%arg0: i32, %arg1: i32) -> (i32, i32) {
    %c0_i32 = arith.constant 0 : i32
    %c0_i32_0 = arith.constant 0 : i32
    %c0_i32_1 = arith.constant 0 : i32
    return %c0_i32, %c0_i32_0 : i32, i32
  }
  func.func @transform_3(%arg0: i32, %arg1: i32) -> (i32, i32, i32) {
    %c0_i32 = arith.constant 0 : i32
    %c0_i32_0 = arith.constant 0 : i32
    return %arg0, %c0_i32, %arg1 : i32, i32, i32
  }
}

module attributes {stable_mosaic.version = 11 : i64} {
  func.func @_conv_stats_kernel(%arg0: i32, %arg1: i32, %arg2: memref<1x1x8x158xbf16, #tpu.memory_space<vmem>>, %arg3: memref<8x248xbf16, #tpu.memory_space<vmem>>, %arg4: memref<8x1xf32, #tpu.memory_space<vmem>>, %arg5: memref<1x8x128xbf16, #tpu.memory_space<vmem>>, %arg6: memref<1x8x1xf32, #tpu.memory_space<vmem>>, %arg7: memref<1x8x1xf32, #tpu.memory_space<vmem>>, %arg8: memref<248x128xbf16, #tpu.memory_space<vmem>>) attributes {dimension_semantics = [#tpu.dimension_semantics<parallel>, #tpu.dimension_semantics<arbitrary>], iteration_bounds = array<i64: 2, 1>, scalar_prefetch = 0 : i64, scratch_operands = 1 : i64, tpu.core_type = #tpu.core_type<tc>, window_params = [{transform_indices = @transform_0, window_bounds = array<i64: 1, 1, 8, 158>}, {pipeline_mode = #tpu.pipeline_mode<synchronous>, transform_indices = @transform_1, window_bounds = array<i64: 8, 248>}, {pipeline_mode = #tpu.pipeline_mode<synchronous>, transform_indices = @transform_2, window_bounds = array<i64: 8, 1>}, {transform_indices = @transform_3, window_bounds = array<i64: 1, 8, 128>}, {transform_indices = @transform_4, window_bounds = array<i64: 1, 8, 1>}, {transform_indices = @transform_5, window_bounds = array<i64: 1, 8, 1>}]} {
    %c0 = arith.constant 0 : index
    %c0_0 = arith.constant 0 : index
    %c0_1 = arith.constant 0 : index
    %c0_2 = arith.constant 0 : index
    %0 = vector.load %arg2[%c0, %c0_0, %c0_1, %c0_2] : memref<1x1x8x158xbf16, #tpu.memory_space<vmem>>, vector<1x1x8x128xbf16>
    %1 = vector.shape_cast %0 : vector<1x1x8x128xbf16> to vector<8x128xbf16>
    %c0_3 = arith.constant 0 : index
    %c0_4 = arith.constant 0 : index
    %2 = vector.load %arg8[%c0_3, %c0_4] : memref<248x128xbf16, #tpu.memory_space<vmem>>, vector<8x128xbf16>
    tpu.vector_store %arg8[%c0_3, %c0_4], %1 {strides = array<i32>} : memref<248x128xbf16, #tpu.memory_space<vmem>>, vector<8x128xbf16>,
    %c0_5 = arith.constant 0 : index
    %c0_6 = arith.constant 0 : index
    %c0_7 = arith.constant 0 : index
    %c1 = arith.constant 1 : index
    %3 = vector.load %arg2[%c0_5, %c0_6, %c0_7, %c1] : memref<1x1x8x158xbf16, #tpu.memory_space<vmem>>, vector<1x1x8x128xbf16>
    %4 = vector.shape_cast %3 : vector<1x1x8x128xbf16> to vector<8x128xbf16>
    %c8 = arith.constant 8 : index
    %c0_8 = arith.constant 0 : index
    %5 = vector.load %arg8[%c8, %c0_8] : memref<248x128xbf16, #tpu.memory_space<vmem>>, vector<8x128xbf16>
    tpu.vector_store %arg8[%c8, %c0_8], %4 {strides = array<i32>} : memref<248x128xbf16, #tpu.memory_space<vmem>>, vector<8x128xbf16>,
    %c0_9 = arith.constant 0 : index
    %c0_10 = arith.constant 0 : index
    %c0_11 = arith.constant 0 : index
    %c2 = arith.constant 2 : index
    %6 = vector.load %arg2[%c0_9, %c0_10, %c0_11, %c2] : memref<1x1x8x158xbf16, #tpu.memory_space<vmem>>, vector<1x1x8x128xbf16>
    %7 = vector.shape_cast %6 : vector<1x1x8x128xbf16> to vector<8x128xbf16>
    %c16 = arith.constant 16 : index
    %c0_12 = arith.constant 0 : index
    %8 = vector.load %arg8[%c16, %c0_12] : memref<248x128xbf16, #tpu.memory_space<vmem>>, vector<8x128xbf16>
    tpu.vector_store %arg8[%c16, %c0_12], %7 {strides = array<i32>} : memref<248x128xbf16, #tpu.memory_space<vmem>>, vector<8x128xbf16>,
    %c0_13 = arith.constant 0 : index
    %c0_14 = arith.constant 0 : index
    %c0_15 = arith.constant 0 : index
    %c3 = arith.constant 3 : index
    %9 = vector.load %arg2[%c0_13, %c0_14, %c0_15, %c3] : memref<1x1x8x158xbf16, #tpu.memory_space<vmem>>, vector<1x1x8x128xbf16>
    %10 = vector.shape_cast %9 : vector<1x1x8x128xbf16> to vector<8x128xbf16>
    %c24 = arith.constant 24 : index
    %c0_16 = arith.constant 0 : index
    %11 = vector.load %arg8[%c24, %c0_16] : memref<248x128xbf16, #tpu.memory_space<vmem>>, vector<8x128xbf16>
    tpu.vector_store %arg8[%c24, %c0_16], %10 {strides = array<i32>} : memref<248x128xbf16, #tpu.memory_space<vmem>>, vector<8x128xbf16>,
    %c0_17 = arith.constant 0 : index
    %c0_18 = arith.constant 0 : index
    %c0_19 = arith.constant 0 : index
    %c4 = arith.constant 4 : index
    %12 = vector.load %arg2[%c0_17, %c0_18, %c0_19, %c4] : memref<1x1x8x158xbf16, #tpu.memory_space<vmem>>, vector<1x1x8x128xbf16>
    %13 = vector.shape_cast %12 : vector<1x1x8x128xbf16> to vector<8x128xbf16>
    %c32 = arith.constant 32 : index
    %c0_20 = arith.constant 0 : index
    %14 = vector.load %arg8[%c32, %c0_20] : memref<248x128xbf16, #tpu.memory_space<vmem>>, vector<8x128xbf16>
    tpu.vector_store %arg8[%c32, %c0_20], %13 {strides = array<i32>} : memref<248x128xbf16, #tpu.memory_space<vmem>>, vector<8x128xbf16>,
    %c0_21 = arith.constant 0 : index
    %c0_22 = arith.constant 0 : index
    %c0_23 = arith.constant 0 : index
    %c5 = arith.constant 5 : index
    %15 = vector.load %arg2[%c0_21, %c0_22, %c0_23, %c5] : memref<1x1x8x158xbf16, #tpu.memory_space<vmem>>, vector<1x1x8x128xbf16>
    %16 = vector.shape_cast %15 : vector<1x1x8x128xbf16> to vector<8x128xbf16>
    %c40 = arith.constant 40 : index
    %c0_24 = arith.constant 0 : index
    %17 = vector.load %arg8[%c40, %c0_24] : memref<248x128xbf16, #tpu.memory_space<vmem>>, vector<8x128xbf16>
    tpu.vector_store %arg8[%c40, %c0_24], %16 {strides = array<i32>} : memref<248x128xbf16, #tpu.memory_space<vmem>>, vector<8x128xbf16>,
    %c0_25 = arith.constant 0 : index
    %c0_26 = arith.constant 0 : index
    %c0_27 = arith.constant 0 : index
    %c6 = arith.constant 6 : index
    %18 = vector.load %arg2[%c0_25, %c0_26, %c0_27, %c6] : memref<1x1x8x158xbf16, #tpu.memory_space<vmem>>, vector<1x1x8x128xbf16>
    %19 = vector.shape_cast %18 : vector<1x1x8x128xbf16> to vector<8x128xbf16>
    %c48 = arith.constant 48 : index
    %c0_28 = arith.constant 0 : index
    %20 = vector.load %arg8[%c48, %c0_28] : memref<248x128xbf16, #tpu.memory_space<vmem>>, vector<8x128xbf16>
    tpu.vector_store %arg8[%c48, %c0_28], %19 {strides = array<i32>} : memref<248x128xbf16, #tpu.memory_space<vmem>>, vector<8x128xbf16>,
    %c0_29 = arith.constant 0 : index
    %c0_30 = arith.constant 0 : index
    %c0_31 = arith.constant 0 : index
    %c7 = arith.constant 7 : index
    %21 = vector.load %arg2[%c0_29, %c0_30, %c0_31, %c7] : memref<1x1x8x158xbf16, #tpu.memory_space<vmem>>, vector<1x1x8x128xbf16>
    %22 = vector.shape_cast %21 : vector<1x1x8x128xbf16> to vector<8x128xbf16>
    %c56 = arith.constant 56 : index
    %c0_32 = arith.constant 0 : index
    %23 = vector.load %arg8[%c56, %c0_32] : memref<248x128xbf16, #tpu.memory_space<vmem>>, vector<8x128xbf16>
    tpu.vector_store %arg8[%c56, %c0_32], %22 {strides = array<i32>} : memref<248x128xbf16, #tpu.memory_space<vmem>>, vector<8x128xbf16>,
    %c0_33 = arith.constant 0 : index
    %c0_34 = arith.constant 0 : index
    %c0_35 = arith.constant 0 : index
    %c8_36 = arith.constant 8 : index
    %24 = vector.load %arg2[%c0_33, %c0_34, %c0_35, %c8_36] : memref<1x1x8x158xbf16, #tpu.memory_space<vmem>>, vector<1x1x8x128xbf16>
    %25 = vector.shape_cast %24 : vector<1x1x8x128xbf16> to vector<8x128xbf16>
    %c64 = arith.constant 64 : index
    %c0_37 = arith.constant 0 : index
    %26 = vector.load %arg8[%c64, %c0_37] : memref<248x128xbf16, #tpu.memory_space<vmem>>, vector<8x128xbf16>
    tpu.vector_store %arg8[%c64, %c0_37], %25 {strides = array<i32>} : memref<248x128xbf16, #tpu.memory_space<vmem>>, vector<8x128xbf16>,
    %c0_38 = arith.constant 0 : index
    %c0_39 = arith.constant 0 : index
    %c0_40 = arith.constant 0 : index
    %c9 = arith.constant 9 : index
    %27 = vector.load %arg2[%c0_38, %c0_39, %c0_40, %c9] : memref<1x1x8x158xbf16, #tpu.memory_space<vmem>>, vector<1x1x8x128xbf16>
    %28 = vector.shape_cast %27 : vector<1x1x8x128xbf16> to vector<8x128xbf16>
    %c72 = arith.constant 72 : index
    %c0_41 = arith.constant 0 : index
    %29 = vector.load %arg8[%c72, %c0_41] : memref<248x128xbf16, #tpu.memory_space<vmem>>, vector<8x128xbf16>
    tpu.vector_store %arg8[%c72, %c0_41], %28 {strides = array<i32>} : memref<248x128xbf16, #tpu.memory_space<vmem>>, vector<8x128xbf16>,
    %c0_42 = arith.constant 0 : index
    %c0_43 = arith.constant 0 : index
    %c0_44 = arith.constant 0 : index
    %c10 = arith.constant 10 : index
    %30 = vector.load %arg2[%c0_42, %c0_43, %c0_44, %c10] : memref<1x1x8x158xbf16, #tpu.memory_space<vmem>>, vector<1x1x8x128xbf16>
    %31 = vector.shape_cast %30 : vector<1x1x8x128xbf16> to vector<8x128xbf16>
    %c80 = arith.constant 80 : index
    %c0_45 = arith.constant 0 : index
    %32 = vector.load %arg8[%c80, %c0_45] : memref<248x128xbf16, #tpu.memory_space<vmem>>, vector<8x128xbf16>
    tpu.vector_store %arg8[%c80, %c0_45], %31 {strides = array<i32>} : memref<248x128xbf16, #tpu.memory_space<vmem>>, vector<8x128xbf16>,
    %c0_46 = arith.constant 0 : index
    %c0_47 = arith.constant 0 : index
    %c0_48 = arith.constant 0 : index
    %c11 = arith.constant 11 : index
    %33 = vector.load %arg2[%c0_46, %c0_47, %c0_48, %c11] : memref<1x1x8x158xbf16, #tpu.memory_space<vmem>>, vector<1x1x8x128xbf16>
    %34 = vector.shape_cast %33 : vector<1x1x8x128xbf16> to vector<8x128xbf16>
    %c88 = arith.constant 88 : index
    %c0_49 = arith.constant 0 : index
    %35 = vector.load %arg8[%c88, %c0_49] : memref<248x128xbf16, #tpu.memory_space<vmem>>, vector<8x128xbf16>
    tpu.vector_store %arg8[%c88, %c0_49], %34 {strides = array<i32>} : memref<248x128xbf16, #tpu.memory_space<vmem>>, vector<8x128xbf16>,
    %c0_50 = arith.constant 0 : index
    %c0_51 = arith.constant 0 : index
    %c0_52 = arith.constant 0 : index
    %c12 = arith.constant 12 : index
    %36 = vector.load %arg2[%c0_50, %c0_51, %c0_52, %c12] : memref<1x1x8x158xbf16, #tpu.memory_space<vmem>>, vector<1x1x8x128xbf16>
    %37 = vector.shape_cast %36 : vector<1x1x8x128xbf16> to vector<8x128xbf16>
    %c96 = arith.constant 96 : index
    %c0_53 = arith.constant 0 : index
    %38 = vector.load %arg8[%c96, %c0_53] : memref<248x128xbf16, #tpu.memory_space<vmem>>, vector<8x128xbf16>
    tpu.vector_store %arg8[%c96, %c0_53], %37 {strides = array<i32>} : memref<248x128xbf16, #tpu.memory_space<vmem>>, vector<8x128xbf16>,
    %c0_54 = arith.constant 0 : index
    %c0_55 = arith.constant 0 : index
    %c0_56 = arith.constant 0 : index
    %c13 = arith.constant 13 : index
    %39 = vector.load %arg2[%c0_54, %c0_55, %c0_56, %c13] : memref<1x1x8x158xbf16, #tpu.memory_space<vmem>>, vector<1x1x8x128xbf16>
    %40 = vector.shape_cast %39 : vector<1x1x8x128xbf16> to vector<8x128xbf16>
    %c104 = arith.constant 104 : index
    %c0_57 = arith.constant 0 : index
    %41 = vector.load %arg8[%c104, %c0_57] : memref<248x128xbf16, #tpu.memory_space<vmem>>, vector<8x128xbf16>
    tpu.vector_store %arg8[%c104, %c0_57], %40 {strides = array<i32>} : memref<248x128xbf16, #tpu.memory_space<vmem>>, vector<8x128xbf16>,
    %c0_58 = arith.constant 0 : index
    %c0_59 = arith.constant 0 : index
    %c0_60 = arith.constant 0 : index
    %c14 = arith.constant 14 : index
    %42 = vector.load %arg2[%c0_58, %c0_59, %c0_60, %c14] : memref<1x1x8x158xbf16, #tpu.memory_space<vmem>>, vector<1x1x8x128xbf16>
    %43 = vector.shape_cast %42 : vector<1x1x8x128xbf16> to vector<8x128xbf16>
    %c112 = arith.constant 112 : index
    %c0_61 = arith.constant 0 : index
    %44 = vector.load %arg8[%c112, %c0_61] : memref<248x128xbf16, #tpu.memory_space<vmem>>, vector<8x128xbf16>
    tpu.vector_store %arg8[%c112, %c0_61], %43 {strides = array<i32>} : memref<248x128xbf16, #tpu.memory_space<vmem>>, vector<8x128xbf16>,
    %c0_62 = arith.constant 0 : index
    %c0_63 = arith.constant 0 : index
    %c0_64 = arith.constant 0 : index
    %c15 = arith.constant 15 : index
    %45 = vector.load %arg2[%c0_62, %c0_63, %c0_64, %c15] : memref<1x1x8x158xbf16, #tpu.memory_space<vmem>>, vector<1x1x8x128xbf16>
    %46 = vector.shape_cast %45 : vector<1x1x8x128xbf16> to vector<8x128xbf16>
    %c120 = arith.constant 120 : index
    %c0_65 = arith.constant 0 : index
    %47 = vector.load %arg8[%c120, %c0_65] : memref<248x128xbf16, #tpu.memory_space<vmem>>, vector<8x128xbf16>
    tpu.vector_store %arg8[%c120, %c0_65], %46 {strides = array<i32>} : memref<248x128xbf16, #tpu.memory_space<vmem>>, vector<8x128xbf16>,
    %c0_66 = arith.constant 0 : index
    %c0_67 = arith.constant 0 : index
    %c0_68 = arith.constant 0 : index
    %c16_69 = arith.constant 16 : index
    %48 = vector.load %arg2[%c0_66, %c0_67, %c0_68, %c16_69] : memref<1x1x8x158xbf16, #tpu.memory_space<vmem>>, vector<1x1x8x128xbf16>
    %49 = vector.shape_cast %48 : vector<1x1x8x128xbf16> to vector<8x128xbf16>
    %c128 = arith.constant 128 : index
    %c0_70 = arith.constant 0 : index
    %50 = vector.load %arg8[%c128, %c0_70] : memref<248x128xbf16, #tpu.memory_space<vmem>>, vector<8x128xbf16>
    tpu.vector_store %arg8[%c128, %c0_70], %49 {strides = array<i32>} : memref<248x128xbf16, #tpu.memory_space<vmem>>, vector<8x128xbf16>,
    %c0_71 = arith.constant 0 : index
    %c0_72 = arith.constant 0 : index
    %c0_73 = arith.constant 0 : index
    %c17 = arith.constant 17 : index
    %51 = vector.load %arg2[%c0_71, %c0_72, %c0_73, %c17] : memref<1x1x8x158xbf16, #tpu.memory_space<vmem>>, vector<1x1x8x128xbf16>
    %52 = vector.shape_cast %51 : vector<1x1x8x128xbf16> to vector<8x128xbf16>
    %c136 = arith.constant 136 : index
    %c0_74 = arith.constant 0 : index
    %53 = vector.load %arg8[%c136, %c0_74] : memref<248x128xbf16, #tpu.memory_space<vmem>>, vector<8x128xbf16>
    tpu.vector_store %arg8[%c136, %c0_74], %52 {strides = array<i32>} : memref<248x128xbf16, #tpu.memory_space<vmem>>, vector<8x128xbf16>,
    %c0_75 = arith.constant 0 : index
    %c0_76 = arith.constant 0 : index
    %c0_77 = arith.constant 0 : index
    %c18 = arith.constant 18 : index
    %54 = vector.load %arg2[%c0_75, %c0_76, %c0_77, %c18] : memref<1x1x8x158xbf16, #tpu.memory_space<vmem>>, vector<1x1x8x128xbf16>
    %55 = vector.shape_cast %54 : vector<1x1x8x128xbf16> to vector<8x128xbf16>
    %c144 = arith.constant 144 : index
    %c0_78 = arith.constant 0 : index
    %56 = vector.load %arg8[%c144, %c0_78] : memref<248x128xbf16, #tpu.memory_space<vmem>>, vector<8x128xbf16>
    tpu.vector_store %arg8[%c144, %c0_78], %55 {strides = array<i32>} : memref<248x128xbf16, #tpu.memory_space<vmem>>, vector<8x128xbf16>,
    %c0_79 = arith.constant 0 : index
    %c0_80 = arith.constant 0 : index
    %c0_81 = arith.constant 0 : index
    %c19 = arith.constant 19 : index
    %57 = vector.load %arg2[%c0_79, %c0_80, %c0_81, %c19] : memref<1x1x8x158xbf16, #tpu.memory_space<vmem>>, vector<1x1x8x128xbf16>
    %58 = vector.shape_cast %57 : vector<1x1x8x128xbf16> to vector<8x128xbf16>
    %c152 = arith.constant 152 : index
    %c0_82 = arith.constant 0 : index
    %59 = vector.load %arg8[%c152, %c0_82] : memref<248x128xbf16, #tpu.memory_space<vmem>>, vector<8x128xbf16>
    tpu.vector_store %arg8[%c152, %c0_82], %58 {strides = array<i32>} : memref<248x128xbf16, #tpu.memory_space<vmem>>, vector<8x128xbf16>,
    %c0_83 = arith.constant 0 : index
    %c0_84 = arith.constant 0 : index
    %c0_85 = arith.constant 0 : index
    %c20 = arith.constant 20 : index
    %60 = vector.load %arg2[%c0_83, %c0_84, %c0_85, %c20] : memref<1x1x8x158xbf16, #tpu.memory_space<vmem>>, vector<1x1x8x128xbf16>
    %61 = vector.shape_cast %60 : vector<1x1x8x128xbf16> to vector<8x128xbf16>
    %c160 = arith.constant 160 : index
    %c0_86 = arith.constant 0 : index
    %62 = vector.load %arg8[%c160, %c0_86] : memref<248x128xbf16, #tpu.memory_space<vmem>>, vector<8x128xbf16>
    tpu.vector_store %arg8[%c160, %c0_86], %61 {strides = array<i32>} : memref<248x128xbf16, #tpu.memory_space<vmem>>, vector<8x128xbf16>,
    %c0_87 = arith.constant 0 : index
    %c0_88 = arith.constant 0 : index
    %c0_89 = arith.constant 0 : index
    %c21 = arith.constant 21 : index
    %63 = vector.load %arg2[%c0_87, %c0_88, %c0_89, %c21] : memref<1x1x8x158xbf16, #tpu.memory_space<vmem>>, vector<1x1x8x128xbf16>
    %64 = vector.shape_cast %63 : vector<1x1x8x128xbf16> to vector<8x128xbf16>
    %c168 = arith.constant 168 : index
    %c0_90 = arith.constant 0 : index
    %65 = vector.load %arg8[%c168, %c0_90] : memref<248x128xbf16, #tpu.memory_space<vmem>>, vector<8x128xbf16>
    tpu.vector_store %arg8[%c168, %c0_90], %64 {strides = array<i32>} : memref<248x128xbf16, #tpu.memory_space<vmem>>, vector<8x128xbf16>,
    %c0_91 = arith.constant 0 : index
    %c0_92 = arith.constant 0 : index
    %c0_93 = arith.constant 0 : index
    %c22 = arith.constant 22 : index
    %66 = vector.load %arg2[%c0_91, %c0_92, %c0_93, %c22] : memref<1x1x8x158xbf16, #tpu.memory_space<vmem>>, vector<1x1x8x128xbf16>
    %67 = vector.shape_cast %66 : vector<1x1x8x128xbf16> to vector<8x128xbf16>
    %c176 = arith.constant 176 : index
    %c0_94 = arith.constant 0 : index
    %68 = vector.load %arg8[%c176, %c0_94] : memref<248x128xbf16, #tpu.memory_space<vmem>>, vector<8x128xbf16>
    tpu.vector_store %arg8[%c176, %c0_94], %67 {strides = array<i32>} : memref<248x128xbf16, #tpu.memory_space<vmem>>, vector<8x128xbf16>,
    %c0_95 = arith.constant 0 : index
    %c0_96 = arith.constant 0 : index
    %c0_97 = arith.constant 0 : index
    %c23 = arith.constant 23 : index
    %69 = vector.load %arg2[%c0_95, %c0_96, %c0_97, %c23] : memref<1x1x8x158xbf16, #tpu.memory_space<vmem>>, vector<1x1x8x128xbf16>
    %70 = vector.shape_cast %69 : vector<1x1x8x128xbf16> to vector<8x128xbf16>
    %c184 = arith.constant 184 : index
    %c0_98 = arith.constant 0 : index
    %71 = vector.load %arg8[%c184, %c0_98] : memref<248x128xbf16, #tpu.memory_space<vmem>>, vector<8x128xbf16>
    tpu.vector_store %arg8[%c184, %c0_98], %70 {strides = array<i32>} : memref<248x128xbf16, #tpu.memory_space<vmem>>, vector<8x128xbf16>,
    %c0_99 = arith.constant 0 : index
    %c0_100 = arith.constant 0 : index
    %c0_101 = arith.constant 0 : index
    %c24_102 = arith.constant 24 : index
    %72 = vector.load %arg2[%c0_99, %c0_100, %c0_101, %c24_102] : memref<1x1x8x158xbf16, #tpu.memory_space<vmem>>, vector<1x1x8x128xbf16>
    %73 = vector.shape_cast %72 : vector<1x1x8x128xbf16> to vector<8x128xbf16>
    %c192 = arith.constant 192 : index
    %c0_103 = arith.constant 0 : index
    %74 = vector.load %arg8[%c192, %c0_103] : memref<248x128xbf16, #tpu.memory_space<vmem>>, vector<8x128xbf16>
    tpu.vector_store %arg8[%c192, %c0_103], %73 {strides = array<i32>} : memref<248x128xbf16, #tpu.memory_space<vmem>>, vector<8x128xbf16>,
    %c0_104 = arith.constant 0 : index
    %c0_105 = arith.constant 0 : index
    %c0_106 = arith.constant 0 : index
    %c25 = arith.constant 25 : index
    %75 = vector.load %arg2[%c0_104, %c0_105, %c0_106, %c25] : memref<1x1x8x158xbf16, #tpu.memory_space<vmem>>, vector<1x1x8x128xbf16>
    %76 = vector.shape_cast %75 : vector<1x1x8x128xbf16> to vector<8x128xbf16>
    %c200 = arith.constant 200 : index
    %c0_107 = arith.constant 0 : index
    %77 = vector.load %arg8[%c200, %c0_107] : memref<248x128xbf16, #tpu.memory_space<vmem>>, vector<8x128xbf16>
    tpu.vector_store %arg8[%c200, %c0_107], %76 {strides = array<i32>} : memref<248x128xbf16, #tpu.memory_space<vmem>>, vector<8x128xbf16>,
    %c0_108 = arith.constant 0 : index
    %c0_109 = arith.constant 0 : index
    %c0_110 = arith.constant 0 : index
    %c26 = arith.constant 26 : index
    %78 = vector.load %arg2[%c0_108, %c0_109, %c0_110, %c26] : memref<1x1x8x158xbf16, #tpu.memory_space<vmem>>, vector<1x1x8x128xbf16>
    %79 = vector.shape_cast %78 : vector<1x1x8x128xbf16> to vector<8x128xbf16>
    %c208 = arith.constant 208 : index
    %c0_111 = arith.constant 0 : index
    %80 = vector.load %arg8[%c208, %c0_111] : memref<248x128xbf16, #tpu.memory_space<vmem>>, vector<8x128xbf16>
    tpu.vector_store %arg8[%c208, %c0_111], %79 {strides = array<i32>} : memref<248x128xbf16, #tpu.memory_space<vmem>>, vector<8x128xbf16>,
    %c0_112 = arith.constant 0 : index
    %c0_113 = arith.constant 0 : index
    %c0_114 = arith.constant 0 : index
    %c27 = arith.constant 27 : index
    %81 = vector.load %arg2[%c0_112, %c0_113, %c0_114, %c27] : memref<1x1x8x158xbf16, #tpu.memory_space<vmem>>, vector<1x1x8x128xbf16>
    %82 = vector.shape_cast %81 : vector<1x1x8x128xbf16> to vector<8x128xbf16>
    %c216 = arith.constant 216 : index
    %c0_115 = arith.constant 0 : index
    %83 = vector.load %arg8[%c216, %c0_115] : memref<248x128xbf16, #tpu.memory_space<vmem>>, vector<8x128xbf16>
    tpu.vector_store %arg8[%c216, %c0_115], %82 {strides = array<i32>} : memref<248x128xbf16, #tpu.memory_space<vmem>>, vector<8x128xbf16>,
    %c0_116 = arith.constant 0 : index
    %c0_117 = arith.constant 0 : index
    %c0_118 = arith.constant 0 : index
    %c28 = arith.constant 28 : index
    %84 = vector.load %arg2[%c0_116, %c0_117, %c0_118, %c28] : memref<1x1x8x158xbf16, #tpu.memory_space<vmem>>, vector<1x1x8x128xbf16>
    %85 = vector.shape_cast %84 : vector<1x1x8x128xbf16> to vector<8x128xbf16>
    %c224 = arith.constant 224 : index
    %c0_119 = arith.constant 0 : index
    %86 = vector.load %arg8[%c224, %c0_119] : memref<248x128xbf16, #tpu.memory_space<vmem>>, vector<8x128xbf16>
    tpu.vector_store %arg8[%c224, %c0_119], %85 {strides = array<i32>} : memref<248x128xbf16, #tpu.memory_space<vmem>>, vector<8x128xbf16>,
    %c0_120 = arith.constant 0 : index
    %c0_121 = arith.constant 0 : index
    %c0_122 = arith.constant 0 : index
    %c29 = arith.constant 29 : index
    %87 = vector.load %arg2[%c0_120, %c0_121, %c0_122, %c29] : memref<1x1x8x158xbf16, #tpu.memory_space<vmem>>, vector<1x1x8x128xbf16>
    %88 = vector.shape_cast %87 : vector<1x1x8x128xbf16> to vector<8x128xbf16>
    %c232 = arith.constant 232 : index
    %c0_123 = arith.constant 0 : index
    %89 = vector.load %arg8[%c232, %c0_123] : memref<248x128xbf16, #tpu.memory_space<vmem>>, vector<8x128xbf16>
    tpu.vector_store %arg8[%c232, %c0_123], %88 {strides = array<i32>} : memref<248x128xbf16, #tpu.memory_space<vmem>>, vector<8x128xbf16>,
    %c0_124 = arith.constant 0 : index
    %c0_125 = arith.constant 0 : index
    %c0_126 = arith.constant 0 : index
    %c30 = arith.constant 30 : index
    %90 = vector.load %arg2[%c0_124, %c0_125, %c0_126, %c30] : memref<1x1x8x158xbf16, #tpu.memory_space<vmem>>, vector<1x1x8x128xbf16>
    %91 = vector.shape_cast %90 : vector<1x1x8x128xbf16> to vector<8x128xbf16>
    %c240 = arith.constant 240 : index
    %c0_127 = arith.constant 0 : index
    %92 = vector.load %arg8[%c240, %c0_127] : memref<248x128xbf16, #tpu.memory_space<vmem>>, vector<8x128xbf16>
    tpu.vector_store %arg8[%c240, %c0_127], %91 {strides = array<i32>} : memref<248x128xbf16, #tpu.memory_space<vmem>>, vector<8x128xbf16>,
    %c0_128 = arith.constant 0 : index
    %c0_129 = arith.constant 0 : index
    %93 = vector.load %arg3[%c0_128, %c0_129] : memref<8x248xbf16, #tpu.memory_space<vmem>>, vector<8x248xbf16>
    %c0_130 = arith.constant 0 : index
    %c0_131 = arith.constant 0 : index
    %94 = vector.load %arg8[%c0_130, %c0_131] : memref<248x128xbf16, #tpu.memory_space<vmem>>, vector<248x128xbf16>
    %cst = arith.constant dense<0.000000e+00> : vector<8x128xf32>
    %95 = tpu.matmul %93, %94, %cst {dimension_numbers = #tpu.dot_dimension_numbers<[1], [0], [0], [1], [0, 0, 1, 1], [], []>} : vector<8x248xbf16>, vector<248x128xbf16>, vector<8x128xf32> -> vector<8x128xf32>
    %c0_132 = arith.constant 0 : index
    %c0_133 = arith.constant 0 : index
    %96 = vector.load %arg4[%c0_132, %c0_133] : memref<8x1xf32, #tpu.memory_space<vmem>>, vector<8x1xf32>
    %97 = vector.broadcast %96 : vector<8x1xf32> to vector<8x128xf32>
    %98 = arith.addf %95, %97 : vector<8x128xf32>
    %99 = arith.truncf %98 : vector<8x128xf32> to vector<8x128xbf16>
    %c0_134 = arith.constant 0 : index
    %c0_135 = arith.constant 0 : index
    %c0_136 = arith.constant 0 : index
    %100 = vector.load %arg5[%c0_134, %c0_135, %c0_136] : memref<1x8x128xbf16, #tpu.memory_space<vmem>>, vector<1x8x128xbf16>
    %101 = vector.shape_cast %100 : vector<1x8x128xbf16> to vector<8x128xbf16>
    %102 = vector.shape_cast %99 : vector<8x128xbf16> to vector<1x8x128xbf16>
    tpu.vector_store %arg5[%c0_134, %c0_135, %c0_136], %102 {strides = array<i32>} : memref<1x8x128xbf16, #tpu.memory_space<vmem>>, vector<1x8x128xbf16>,
    %c0_i32 = arith.constant 0 : i32
    %103 = arith.cmpi eq, %arg1, %c0_i32 : i32
    %104 = arith.extui %103 : i1 to i32
    %c0_i32_137 = arith.constant 0 : i32
    %105 = arith.cmpi ne, %104, %c0_i32_137 : i32
    scf.if %105 {
      %cst_153 = arith.constant 0.000000e+00 : f32
      %133 = vector.broadcast %cst_153 : f32 to vector<1x8x1xf32>
      %c0_154 = arith.constant 0 : index
      %c0_155 = arith.constant 0 : index
      %c0_156 = arith.constant 0 : index
      %134 = vector.load %arg6[%c0_154, %c0_155, %c0_156] : memref<1x8x1xf32, #tpu.memory_space<vmem>>, vector<1x8x1xf32>
      tpu.vector_store %arg6[%c0_154, %c0_155, %c0_156], %133 {strides = array<i32>} : memref<1x8x1xf32, #tpu.memory_space<vmem>>, vector<1x8x1xf32>,
      %cst_157 = arith.constant 0.000000e+00 : f32
      %135 = vector.broadcast %cst_157 : f32 to vector<1x8x1xf32>
      %c0_158 = arith.constant 0 : index
      %c0_159 = arith.constant 0 : index
      %c0_160 = arith.constant 0 : index
      %136 = vector.load %arg7[%c0_158, %c0_159, %c0_160] : memref<1x8x1xf32, #tpu.memory_space<vmem>>, vector<1x8x1xf32>
      tpu.vector_store %arg7[%c0_158, %c0_159, %c0_160], %135 {strides = array<i32>} : memref<1x8x1xf32, #tpu.memory_space<vmem>>, vector<1x8x1xf32>,
    } else {
    }
    %c128_i32 = arith.constant 128 : i32
    %106 = arith.muli %arg1, %c128_i32 : i32
    %107 = tpu.iota {dimensions = array<i32: 1>} : vector<1x128xi32>
    %108 = vector.broadcast %106 : i32 to vector<1x128xi32>
    %109 = arith.addi %108, %107 : vector<1x128xi32>
    %c64_i32 = arith.constant 64 : i32
    %110 = vector.broadcast %c64_i32 : i32 to vector<1x128xi32>
    %111 = arith.cmpi slt, %109, %110 : vector<1x128xi32>
    %cst_138 = arith.constant 0.000000e+00 : f32
    %112 = vector.shape_cast %111 : vector<1x128xi1> to vector<1x128xi1>
    %113 = vector.broadcast %112 : vector<1x128xi1> to vector<8x128xi1>
    %114 = vector.broadcast %cst_138 : f32 to vector<8x128xf32>
    %115 = arith.select %113, %98, %114 : vector<8x128xi1>, vector<8x128xf32>
    %c0_139 = arith.constant 0 : index
    %c0_140 = arith.constant 0 : index
    %c0_141 = arith.constant 0 : index
    %116 = vector.load %arg6[%c0_139, %c0_140, %c0_141] : memref<1x8x1xf32, #tpu.memory_space<vmem>>, vector<1x8x1xf32>
    %117 = vector.shape_cast %116 : vector<1x8x1xf32> to vector<8x1xf32>
    %cst_142 = arith.constant dense<0.000000e+00> : vector<8xf32>
    %118 = vector.multi_reduction <add>, %115, %cst_142 [1] : vector<8x128xf32> to vector<8xf32>
    %119 = vector.shape_cast %118 : vector<8xf32> to vector<8x1xf32>
    %120 = arith.addf %117, %119 : vector<8x1xf32>
    %c0_143 = arith.constant 0 : index
    %c0_144 = arith.constant 0 : index
    %c0_145 = arith.constant 0 : index
    %121 = vector.load %arg6[%c0_143, %c0_144, %c0_145] : memref<1x8x1xf32, #tpu.memory_space<vmem>>, vector<1x8x1xf32>
    %122 = vector.shape_cast %121 : vector<1x8x1xf32> to vector<8x1xf32>
    %123 = vector.shape_cast %120 : vector<8x1xf32> to vector<1x8x1xf32>
    tpu.vector_store %arg6[%c0_143, %c0_144, %c0_145], %123 {strides = array<i32>} : memref<1x8x1xf32, #tpu.memory_space<vmem>>, vector<1x8x1xf32>,
    %c0_146 = arith.constant 0 : index
    %c0_147 = arith.constant 0 : index
    %c0_148 = arith.constant 0 : index
    %124 = vector.load %arg7[%c0_146, %c0_147, %c0_148] : memref<1x8x1xf32, #tpu.memory_space<vmem>>, vector<1x8x1xf32>
    %125 = vector.shape_cast %124 : vector<1x8x1xf32> to vector<8x1xf32>
    %126 = arith.mulf %115, %115 : vector<8x128xf32>
    %cst_149 = arith.constant dense<0.000000e+00> : vector<8xf32>
    %127 = vector.multi_reduction <add>, %126, %cst_149 [1] : vector<8x128xf32> to vector<8xf32>
    %128 = vector.shape_cast %127 : vector<8xf32> to vector<8x1xf32>
    %129 = arith.addf %125, %128 : vector<8x1xf32>
    %c0_150 = arith.constant 0 : index
    %c0_151 = arith.constant 0 : index
    %c0_152 = arith.constant 0 : index
    %130 = vector.load %arg7[%c0_150, %c0_151, %c0_152] : memref<1x8x1xf32, #tpu.memory_space<vmem>>, vector<1x8x1xf32>
    %131 = vector.shape_cast %130 : vector<1x8x1xf32> to vector<8x1xf32>
    %132 = vector.shape_cast %129 : vector<8x1xf32> to vector<1x8x1xf32>
    tpu.vector_store %arg7[%c0_150, %c0_151, %c0_152], %132 {strides = array<i32>} : memref<1x8x1xf32, #tpu.memory_space<vmem>>, vector<1x8x1xf32>,
    return
  }
  func.func @transform_0(%arg0: i32, %arg1: i32) -> (i32, i32, i32, i32) {
    %c0_i32 = arith.constant 0 : i32
    %c0_i32_0 = arith.constant 0 : i32
    %c0_i32_1 = arith.constant 0 : i32
    return %arg0, %arg1, %c0_i32, %c0_i32_0 : i32, i32, i32, i32
  }
  func.func @transform_1(%arg0: i32, %arg1: i32) -> (i32, i32) {
    %c0_i32 = arith.constant 0 : i32
    %c0_i32_0 = arith.constant 0 : i32
    %c0_i32_1 = arith.constant 0 : i32
    return %c0_i32, %c0_i32_0 : i32, i32
  }
  func.func @transform_2(%arg0: i32, %arg1: i32) -> (i32, i32) {
    %c0_i32 = arith.constant 0 : i32
    %c0_i32_0 = arith.constant 0 : i32
    %c0_i32_1 = arith.constant 0 : i32
    return %c0_i32, %c0_i32_0 : i32, i32
  }
  func.func @transform_3(%arg0: i32, %arg1: i32) -> (i32, i32, i32) {
    %c0_i32 = arith.constant 0 : i32
    %c0_i32_0 = arith.constant 0 : i32
    return %arg0, %c0_i32, %arg1 : i32, i32, i32
  }
  func.func @transform_4(%arg0: i32, %arg1: i32) -> (i32, i32, i32) {
    %c0_i32 = arith.constant 0 : i32
    %c0_i32_0 = arith.constant 0 : i32
    %c0_i32_1 = arith.constant 0 : i32
    return %arg0, %c0_i32, %c0_i32_0 : i32, i32, i32
  }
  func.func @transform_5(%arg0: i32, %arg1: i32) -> (i32, i32, i32) {
    %c0_i32 = arith.constant 0 : i32
    %c0_i32_0 = arith.constant 0 : i32
    %c0_i32_1 = arith.constant 0 : i32
    return %arg0, %c0_i32, %c0_i32_0 : i32, i32, i32
  }
}

</mosaic_0001>

<llo_original>
// kernel: model_conv1_forward.3
$region0: #{model_conv1_forward.3}
  #allocation0 [shape = 'u32[]', space=smem, size = 0x4, offset = 0x4, fixed_abs, tag = 'smem constant byte address 0x4 - core index']
  #allocation1 [shape = 'u32[144,128]{1,0:T(1,128)}', space=vmem, size = 0x12000, scoped, tag = 'internal scratch']
  %s0 = inlined_call_operand.vmem [shape: bf16[2,8,128], index: 0, kind: input, shape index: {}]
  %s1 = inlined_call_operand.vmem [shape: f32[8,1], index: 1, kind: input, shape index: {}]
  %s2 = inlined_call_operand.vmem [shape: f32[8,1], index: 2, kind: input, shape index: {}]
  %s3 = inlined_call_operand.hbm [shape: f32[2,8,128], index: 3, kind: output, shape index: {}]
  %s4 = sld [smem:[#allocation0]]
  $region45: #{model_conv1_forward.3} parent=0
    _
  %s6 = ssub.s32 1, %s4
  %s7 = scalar_select 0, %s6, %s4
  $region1: #{model_conv1_forward.3} parent=0
    #allocation2 [shape = 'u8[8192]{0}', space=vmem, size = 0x2000, scoped, tag = 'output window, operand 0']
    #allocation3 [shape = 's32[2]{0}', space=sflag, size = 0x8, scoped, tag = 'scoped memory for model_conv1_forward.3']
    %8 = vsyncpa [#allocation3], 0
    %s9 = scalar_lea.sflag [#allocation3], 1
    %10 = vsyncpa %s9, 0
    loop: start=0, step=1, limit=4
    $region2: #{model_conv1_forward.3} parent=1 // loop_pre_header
      _
    $region3: #{model_conv1_forward.3} parent=1 // loop_header
      %s12 = sphi 0, %s16
      %p13 = scmp.ge.s32.totalorder %s12, 4
      %s19 = sphi 0, %s31
      %s20 = sphi 0, %s27
      %s21 = sphi 0, %s19
      %s22 = sphi 0, %s20
      %s23 = sphi 0, %s21
      %s24 = sphi 0, %s22
      %s36 = sphi 0, %s38
      %s39 = sphi 0, %s36
      %s40 = sphi 0, %s39
      %s56 = sphi 0, %s40
      %s60 = sphi 0, %s60
      %s62 = sphi 0, %s60
      %s63 = sphi 0, %s62
      %s77 = sphi 0, %s63
      %s81 = sphi 0, %s81
      %s83 = sphi 0, %s81
      %s84 = sphi 0, %s83
      %s98 = sphi 0, %s84
      %s106 = sphi 0, %s108
      %s109 = sphi 0, %s106
      %s110 = sphi 0, %s109
      %s126 = sphi 0, %s110
    $region4: #{model_conv1_forward.3} parent=1 // loop_header_branch
      %15 = sbr.rel (%p13) target = $region8
    $region5: #{model_conv1_forward.3} parent=1 // loop_body
      %s17 = ssub.s32 %s12, 1
      %s18 = ssub.s32 %s12, 2
      %s25 = sadd.s32 1, %s20
      %p26 = scmp.ge.s32.totalorder %s25, 1
      %s27 = scalar_select %p26, 0, %s25
      %s28 = sadd.s32 1, %s19
      %s29 = scalar_select %p26, %s28, %s19
      %p30 = scmp.ge.s32.totalorder %s29, 2
      %s31 = scalar_select %p30, 0, %s29
      %s32 = ssub.s32 %s19, %s31
      %s33 = ssub.s32 %s20, %s27
      %s34 = sor.u32 %s32, %s33
      %p35 = scmp.eq.s32.totalorder %s34, 0
      %s37 = sadd.s32 %s36, 1
      %s38 = scalar_select %p35, %s36, %s37
      %p41 = pneg %p35
      %p42 = scmp.eq.s32.totalorder %s12, 1
      %p43 = por %p41, %p42
      %p44 = scmp.ne.s32.totalorder %s36, %s39
      %p45 = scmp.eq.s32.totalorder %s12, 0
      %p46 = por %p44, %p45
      %p47 = scmp.ne.s32.totalorder %s36, %s39
      %p48 = scmp.eq.s32.totalorder %s17, 1
      %p49 = por %p47, %p48
      %p50 = scmp.ne.s32.totalorder %s39, %s40
      %p51 = scmp.eq.s32.totalorder %s17, 0
      %p52 = por %p50, %p51
      %p53 = scmp.ne.s32.totalorder %s39, %s40
      %p54 = scmp.eq.s32.totalorder %s18, 1
      %p55 = por %p53, %p54
      %p57 = scmp.ne.s32.totalorder %s40, %s56
      %p58 = scmp.eq.s32.totalorder %s18, 0
      %p59 = por %p57, %p58
      %s61 = sadd.s32 %s60, 1
      %p64 = scmp.eq.s32.totalorder %s12, 1
      %p65 = scmp.ne.s32.totalorder %s60, %s62
      %p66 = scmp.eq.s32.totalorder %s12, 0
      %p67 = por %p65, %p66
      %p68 = scmp.ne.s32.totalorder %s60, %s62
      %p69 = scmp.eq.s32.totalorder %s17, 1
      %p70 = por %p68, %p69
      %p71 = scmp.ne.s32.totalorder %s62, %s63
      %p72 = scmp.eq.s32.totalorder %s17, 0
      %p73 = por %p71, %p72
      %p74 = scmp.ne.s32.totalorder %s62, %s63
      %p75 = scmp.eq.s32.totalorder %s18, 1
      %p76 = por %p74, %p75
      %p78 = scmp.ne.s32.totalorder %s63, %s77
      %p79 = scmp.eq.s32.totalorder %s18, 0
      %p80 = por %p78, %p79
      %s82 = sadd.s32 %s81, 1
      %p85 = scmp.eq.s32.totalorder %s12, 1
      %p86 = scmp.ne.s32.totalorder %s81, %s83
      %p87 = scmp.eq.s32.totalorder %s12, 0
      %p88 = por %p86, %p87
      %p89 = scmp.ne.s32.totalorder %s81, %s83
      %p90 = scmp.eq.s32.totalorder %s17, 1
      %p91 = por %p89, %p90
      %p92 = scmp.ne.s32.totalorder %s83, %s84
      %p93 = scmp.eq.s32.totalorder %s17, 0
      %p94 = por %p92, %p93
      %p95 = scmp.ne.s32.totalorder %s83, %s84
      %p96 = scmp.eq.s32.totalorder %s18, 1
      %p97 = por %p95, %p96
      %p99 = scmp.ne.s32.totalorder %s84, %s98
      %p100 = scmp.eq.s32.totalorder %s18, 0
      %p101 = por %p99, %p100
      %s102 = ssub.s32 %s19, %s31
      %s103 = ssub.s32 %s20, %s27
      %s104 = sor.u32 %s102, %s103
      %p105 = scmp.eq.s32.totalorder %s104, 0
      %s107 = sadd.s32 %s106, 1
      %s108 = scalar_select %p105, %s106, %s107
      %p111 = pneg %p105
      %p112 = scmp.eq.s32.totalorder %s12, 1
      %p113 = por %p111, %p112
      %p114 = scmp.ne.s32.totalorder %s106, %s109
      %p115 = scmp.eq.s32.totalorder %s12, 0
      %p116 = por %p114, %p115
      %p117 = scmp.ne.s32.totalorder %s106, %s109
      %p118 = scmp.eq.s32.totalorder %s17, 1
      %p119 = por %p117, %p118
      %p120 = scmp.ne.s32.totalorder %s109, %s110
      %p121 = scmp.eq.s32.totalorder %s17, 0
      %p122 = por %p120, %p121
      %p123 = scmp.ne.s32.totalorder %s109, %s110
      %p124 = scmp.eq.s32.totalorder %s18, 1
      %p125 = por %p123, %p124
      %p127 = scmp.ne.s32.totalorder %s110, %s126
      %p128 = scmp.eq.s32.totalorder %s18, 0
      %p129 = por %p127, %p128
      %p130 = scmp.le.s32.totalorder 1, %s12
      %p131 = scmp.lt.s32.totalorder %s12, 3
      %p132 = pnand %p130, %p131
      %p133 = pneg %p132
      // Predicated region
      $region9: #{model_conv1_forward.3} parent=5 // pred_check
        _
      $region10: #{model_conv1_forward.3} parent=5 // pred_check_branch
        %135 = sbr.rel (%p132) target = $region12
      $region11: #{model_conv1_forward.3} parent=5 // pred_region
        %s136 = ssub.s32 %s12, 1
        // Predicated region
        $region13: #{model_conv1_forward.3} parent=11 // pred_check
          %p137 = pneg %p73
        $region14: #{model_conv1_forward.3} parent=11 // pred_check_branch
          %139 = sbr.rel (%p137) target = $region16
        $region15: #{model_conv1_forward.3} parent=11 // pred_region
          _
        $region16: #{model_conv1_forward.3} parent=11 // pred_fallthru
          _
        // Predicated region
        $region17: #{model_conv1_forward.3} parent=11 // pred_check
          %p140 = pneg %p94
        $region18: #{model_conv1_forward.3} parent=11 // pred_check_branch
          %142 = sbr.rel (%p140) target = $region20
        $region19: #{model_conv1_forward.3} parent=11 // pred_region
          _
        $region20: #{model_conv1_forward.3} parent=11 // pred_fallthru
          _
      $region12: #{model_conv1_forward.3} parent=5 // pred_fallthru
        _
      %p143 = scmp.lt.s32.totalorder %s12, 2
      // Predicated region
      $region21: #{model_conv1_forward.3} parent=5 // pred_check
        %p144 = pneg %p143
      $region22: #{model_conv1_forward.3} parent=5 // pred_check_branch
        %146 = sbr.rel (%p144) target = $region24
      $region23: #{model_conv1_forward.3} parent=5 // pred_region
        // Predicated region
        $region25: #{model_conv1_forward.3} parent=23 // pred_check
          %p147 = pneg %p46
        $region26: #{model_conv1_forward.3} parent=23 // pred_check_branch
          %149 = sbr.rel (%p147) target = $region28
        $region27: #{model_conv1_forward.3} parent=23 // pred_region
          %p150 = scmp.lt.s32.totalorder %s19, 1
          %s151 = scalar_select %p150, %s19, 1
          %p152 = scmp.lt.s32.totalorder %s20, 0
          %s153 = scalar_select %p152, %s20, 0
          %s154 = sadd.s32 %s153, %s151
          %s155 = smul.addr %s154, 4
          %s156 = scalar_lea.vmem %s0, %s155
        $region28: #{model_conv1_forward.3} parent=23 // pred_fallthru
          _
      $region24: #{model_conv1_forward.3} parent=5 // pred_fallthru
        _
      %p157 = scmp.le.s32.totalorder 1, %s12
      %p158 = scmp.lt.s32.totalorder %s12, 3
      %p159 = pnand %p157, %p158
      %p160 = pneg %p159
      // Predicated region
      $region29: #{model_conv1_forward.3} parent=5 // pred_check
        _
      $region30: #{model_conv1_forward.3} parent=5 // pred_check_branch
        %162 = sbr.rel (%p159) target = $region32
      $region31: #{model_conv1_forward.3} parent=5 // pred_region
        %s163 = ssub.s32 %s12, 1
        %p164 = scmp.lt.s32.totalorder %s21, 1
        %s165 = scalar_select %p164, %s21, 1
        %p166 = scmp.lt.s32.totalorder %s22, 0
        %s167 = scalar_select %p166, %s22, 0
        %s168 = sadd.s32 %s167, %s165
        %s169 = smul.addr %s168, 4
        %s170 = scalar_lea.vmem %s0, %s169
        %p171 = pneg %p52
        %p172 = pneg %p49
        %p173 = pneg %p73
        %p174 = pneg %p70
        %p175 = pneg %p94
        %p176 = pneg %p91
        %p177 = pneg %p122
        %p178 = pneg %p119
        %s179 = sand.u32 %s109, 1
        %s180 = scalar_lea.sflag [#allocation3], %s179
        %s181 = sand.u32 %s109, 1
        %s182 = smul.addr %s181, 8
        %s183 = scalar_lea.vmem [#allocation2], %s182
        %p184 = scmp.lt.s32.totalorder %s21, 1
        %s185 = scalar_select %p184, %s21, 1
        %p186 = scmp.lt.s32.totalorder %s22, 0
        %s187 = scalar_select %p186, %s22, 0
        %s188 = sadd.s32 %s187, %s185
        %s189 = smul.addr %s188, 4
        %s190 = scalar_lea.vmem %s0, %s189
        %v191 = vld [vmem:[%s190] sm:$0xf]
        %v192 = vunpack.c.l.bf16 %v191
        %v193 = vld [vmem:[%s1] sm:$0xff]
        %195 = vset.pattern.permute.xlu0 0
        %196 = vperm.xlu0 %195, %v193
        %v197 = vpop.permute.xlu0 %196
        %v199 = vmul.f32 %v192, %v197
        %v200 = vld [vmem:[%s2] sm:$0xff]
        %202 = vset.pattern.permute.xlu0 0
        %203 = vperm.xlu0 %202, %v200
        %v204 = vpop.permute.xlu0 %203
        %v206 = vadd.f32 %v199, %v204
        %v207 = vmax.f32 %v206, 0.0
        %208 = vst [vmem:[%s183] sm:$0xff] %v207
        %s209 = sand.u32 %s109, 1
        %s210 = scalar_lea.sflag [#allocation3], %s209
        %s211 = sand.u32 %s109, 1
        %s212 = smul.addr %s211, 8
        %s213 = scalar_lea.vmem [#allocation2], %s212
        // Predicated region
        $region33: #{model_conv1_forward.3} parent=31 // pred_check
          %p214 = pneg %p119
        $region34: #{model_conv1_forward.3} parent=31 // pred_check_branch
          %216 = sbr.rel (%p214) target = $region36
        $region35: #{model_conv1_forward.3} parent=31 // pred_region
          %s218 = ssub.s32 128, 128
          %219 = vsyncadd %s210, %s218
          %s220 = sadd.s32 %s22, %s21
          %s221 = smul.addr %s220, 128
          %s222 = scalar_lea.hbm %s3, %s221
          %s224 = sshll.u32 %s213, 4
          %s225 = int_to_ptr.vmem [resolvable:$true] %s224
          %227 = dma.vmem_to_hbm [thread:$0]  %s225, 128, %s222, %s210
        $region36: #{model_conv1_forward.3} parent=31 // pred_fallthru
          _
      $region32: #{model_conv1_forward.3} parent=5 // pred_fallthru
        _
      %p228 = scmp.le.s32.totalorder 2, %s12
      // Predicated region
      $region37: #{model_conv1_forward.3} parent=5 // pred_check
        %p229 = pneg %p228
      $region38: #{model_conv1_forward.3} parent=5 // pred_check_branch
        %231 = sbr.rel (%p229) target = $region40
      $region39: #{model_conv1_forward.3} parent=5 // pred_region
        %s232 = ssub.s32 %s12, 2
        // Predicated region
        $region41: #{model_conv1_forward.3} parent=39 // pred_check
          %p233 = pneg %p125
        $region42: #{model_conv1_forward.3} parent=39 // pred_check_branch
          %235 = sbr.rel (%p233) target = $region44
        $region43: #{model_conv1_forward.3} parent=39 // pred_region
          %s236 = sand.u32 %s110, 1
          %s237 = scalar_lea.sflag [#allocation3], %s236
          %s238 = sand.u32 %s110, 1
          %s239 = smul.addr %s238, 8
          %s240 = scalar_lea.vmem [#allocation2], %s239
          %241 = dma.done %s237, 128
        $region44: #{model_conv1_forward.3} parent=39 // pred_fallthru
          _
      $region40: #{model_conv1_forward.3} parent=5 // pred_fallthru
        _
    $region6: #{model_conv1_forward.3} parent=1 // loop_footer
      %s16 = sadd.s32 1, %s12
    $region7: #{model_conv1_forward.3} parent=1 // loop_footer_branch
      %11 = sbr.rel target = $region3
    $region8: #{model_conv1_forward.3} parent=1 // loop_exit
      _
    %242 = vsyncpa [#allocation3], 1
    %s243 = scalar_lea.sflag [#allocation3], 1
    %244 = vsyncpa %s243, 1

// kernel: model_conv1_forward.2
$region0: #{model_conv1_forward.2}
  #allocation0 [shape = 'u32[]', space=smem, size = 0x4, offset = 0x4, fixed_abs, tag = 'smem constant byte address 0x4 - core index']
  #allocation1 [shape = 'u32[144,128]{1,0:T(1,128)}', space=vmem, size = 0x12000, scoped, tag = 'internal scratch']
  #allocation2 [shape = 'bf16[248,128]{1,0:T(8,128)(2,1)}', space=vmem, size = 0xf800, scoped, tag = 'scratch operand']
  %s0 = inlined_call_operand.vmem [shape: bf16[2,1,8,158], index: 0, kind: input, shape index: {}]
  %s1 = inlined_call_operand.vmem [shape: bf16[8,248], index: 1, kind: input, shape index: {}]
  %s2 = inlined_call_operand.vmem [shape: f32[8,1], index: 2, kind: input, shape index: {}]
  %s3 = inlined_call_operand.vmem [shape: bf16[2,8,128], index: 3, kind: output, shape index: {0}]
  %s4 = inlined_call_operand.vmem [shape: f32[2,8,1], index: 4, kind: output, shape index: {1}]
  %s5 = inlined_call_operand.vmem [shape: f32[2,8,1], index: 5, kind: output, shape index: {2}]
  %6 = xla_tuple %s3, %s4, %s5
  %s7 = sld [smem:[#allocation0]]
  $region65: #{model_conv1_forward.2} parent=0
    _
  %s9 = ssub.s32 1, %s7
  %s10 = scalar_select 0, %s9, %s7
  loop: start=0, step=1, limit=4
  $region2: #{model_conv1_forward.2} parent=0 // loop_pre_header
    _
  $region3: #{model_conv1_forward.2} parent=0 // loop_header
    %s12 = sphi 0, %s16
    %p13 = scmp.ge.s32.totalorder %s12, 4
    %s19 = sphi 0, %s31
    %s20 = sphi 0, %s27
    %s21 = sphi 0, %s19
    %s22 = sphi 0, %s20
    %s23 = sphi 0, %s21
    %s24 = sphi 0, %s22
    %s36 = sphi 0, %s38
    %s39 = sphi 0, %s36
    %s40 = sphi 0, %s39
    %s56 = sphi 0, %s40
    %s60 = sphi 0, %s60
    %s62 = sphi 0, %s60
    %s63 = sphi 0, %s62
    %s77 = sphi 0, %s63
    %s81 = sphi 0, %s81
    %s83 = sphi 0, %s81
    %s84 = sphi 0, %s83
    %s98 = sphi 0, %s84
    %s106 = sphi 0, %s108
    %s109 = sphi 0, %s106
    %s110 = sphi 0, %s109
    %s126 = sphi 0, %s110
    %s132 = sphi 0, %s134
    %s135 = sphi 0, %s132
    %s136 = sphi 0, %s135
    %s152 = sphi 0, %s136
    %s158 = sphi 0, %s160
    %s161 = sphi 0, %s158
    %s162 = sphi 0, %s161
    %s178 = sphi 0, %s162
  $region4: #{model_conv1_forward.2} parent=0 // loop_header_branch
    %15 = sbr.rel (%p13) target = $region8
  $region5: #{model_conv1_forward.2} parent=0 // loop_body
    %s17 = ssub.s32 %s12, 1
    %s18 = ssub.s32 %s12, 2
    %s25 = sadd.s32 1, %s20
    %p26 = scmp.ge.s32.totalorder %s25, 1
    %s27 = scalar_select %p26, 0, %s25
    %s28 = sadd.s32 1, %s19
    %s29 = scalar_select %p26, %s28, %s19
    %p30 = scmp.ge.s32.totalorder %s29, 2
    %s31 = scalar_select %p30, 0, %s29
    %s32 = ssub.s32 %s19, %s31
    %s33 = ssub.s32 %s20, %s27
    %s34 = sor.u32 %s32, %s33
    %p35 = scmp.eq.s32.totalorder %s34, 0
    %s37 = sadd.s32 %s36, 1
    %s38 = scalar_select %p35, %s36, %s37
    %p41 = pneg %p35
    %p42 = scmp.eq.s32.totalorder %s12, 1
    %p43 = por %p41, %p42
    %p44 = scmp.ne.s32.totalorder %s36, %s39
    %p45 = scmp.eq.s32.totalorder %s12, 0
    %p46 = por %p44, %p45
    %p47 = scmp.ne.s32.totalorder %s36, %s39
    %p48 = scmp.eq.s32.totalorder %s17, 1
    %p49 = por %p47, %p48
    %p50 = scmp.ne.s32.totalorder %s39, %s40
    %p51 = scmp.eq.s32.totalorder %s17, 0
    %p52 = por %p50, %p51
    %p53 = scmp.ne.s32.totalorder %s39, %s40
    %p54 = scmp.eq.s32.totalorder %s18, 1
    %p55 = por %p53, %p54
    %p57 = scmp.ne.s32.totalorder %s40, %s56
    %p58 = scmp.eq.s32.totalorder %s18, 0
    %p59 = por %p57, %p58
    %s61 = sadd.s32 %s60, 1
    %p64 = scmp.eq.s32.totalorder %s12, 1
    %p65 = scmp.ne.s32.totalorder %s60, %s62
    %p66 = scmp.eq.s32.totalorder %s12, 0
    %p67 = por %p65, %p66
    %p68 = scmp.ne.s32.totalorder %s60, %s62
    %p69 = scmp.eq.s32.totalorder %s17, 1
    %p70 = por %p68, %p69
    %p71 = scmp.ne.s32.totalorder %s62, %s63
    %p72 = scmp.eq.s32.totalorder %s17, 0
    %p73 = por %p71, %p72
    %p74 = scmp.ne.s32.totalorder %s62, %s63
    %p75 = scmp.eq.s32.totalorder %s18, 1
    %p76 = por %p74, %p75
    %p78 = scmp.ne.s32.totalorder %s63, %s77
    %p79 = scmp.eq.s32.totalorder %s18, 0
    %p80 = por %p78, %p79
    %s82 = sadd.s32 %s81, 1
    %p85 = scmp.eq.s32.totalorder %s12, 1
    %p86 = scmp.ne.s32.totalorder %s81, %s83
    %p87 = scmp.eq.s32.totalorder %s12, 0
    %p88 = por %p86, %p87
    %p89 = scmp.ne.s32.totalorder %s81, %s83
    %p90 = scmp.eq.s32.totalorder %s17, 1
    %p91 = por %p89, %p90
    %p92 = scmp.ne.s32.totalorder %s83, %s84
    %p93 = scmp.eq.s32.totalorder %s17, 0
    %p94 = por %p92, %p93
    %p95 = scmp.ne.s32.totalorder %s83, %s84
    %p96 = scmp.eq.s32.totalorder %s18, 1
    %p97 = por %p95, %p96
    %p99 = scmp.ne.s32.totalorder %s84, %s98
    %p100 = scmp.eq.s32.totalorder %s18, 0
    %p101 = por %p99, %p100
    %s102 = ssub.s32 %s19, %s31
    %s103 = ssub.s32 %s20, %s27
    %s104 = sor.u32 %s102, %s103
    %p105 = scmp.eq.s32.totalorder %s104, 0
    %s107 = sadd.s32 %s106, 1
    %s108 = scalar_select %p105, %s106, %s107
    %p111 = pneg %p105
    %p112 = scmp.eq.s32.totalorder %s12, 1
    %p113 = por %p111, %p112
    %p114 = scmp.ne.s32.totalorder %s106, %s109
    %p115 = scmp.eq.s32.totalorder %s12, 0
    %p116 = por %p114, %p115
    %p117 = scmp.ne.s32.totalorder %s106, %s109
    %p118 = scmp.eq.s32.totalorder %s17, 1
    %p119 = por %p117, %p118
    %p120 = scmp.ne.s32.totalorder %s109, %s110
    %p121 = scmp.eq.s32.totalorder %s17, 0
    %p122 = por %p120, %p121
    %p123 = scmp.ne.s32.totalorder %s109, %s110
    %p124 = scmp.eq.s32.totalorder %s18, 1
    %p125 = por %p123, %p124
    %p127 = scmp.ne.s32.totalorder %s110, %s126
    %p128 = scmp.eq.s32.totalorder %s18, 0
    %p129 = por %p127, %p128
    %s130 = ssub.s32 %s19, %s31
    %p131 = scmp.eq.s32.totalorder %s130, 0
    %s133 = sadd.s32 %s132, 1
    %s134 = scalar_select %p131, %s132, %s133
    %p137 = pneg %p131
    %p138 = scmp.eq.s32.totalorder %s12, 1
    %p139 = por %p137, %p138
    %p140 = scmp.ne.s32.totalorder %s132, %s135
    %p141 = scmp.eq.s32.totalorder %s12, 0
    %p142 = por %p140, %p141
    %p143 = scmp.ne.s32.totalorder %s132, %s135
    %p144 = scmp.eq.s32.totalorder %s17, 1
    %p145 = por %p143, %p144
    %p146 = scmp.ne.s32.totalorder %s135, %s136
    %p147 = scmp.eq.s32.totalorder %s17, 0
    %p148 = por %p146, %p147
    %p149 = scmp.ne.s32.totalorder %s135, %s136
    %p150 = scmp.eq.s32.totalorder %s18, 1
    %p151 = por %p149, %p150
    %p153 = scmp.ne.s32.totalorder %s136, %s152
    %p154 = scmp.eq.s32.totalorder %s18, 0
    %p155 = por %p153, %p154
    %s156 = ssub.s32 %s19, %s31
    %p157 = scmp.eq.s32.totalorder %s156, 0
    %s159 = sadd.s32 %s158, 1
    %s160 = scalar_select %p157, %s158, %s159
    %p163 = pneg %p157
    %p164 = scmp.eq.s32.totalorder %s12, 1
    %p165 = por %p163, %p164
    %p166 = scmp.ne.s32.totalorder %s158, %s161
    %p167 = scmp.eq.s32.totalorder %s12, 0
    %p168 = por %p166, %p167
    %p169 = scmp.ne.s32.totalorder %s158, %s161
    %p170 = scmp.eq.s32.totalorder %s17, 1
    %p171 = por %p169, %p170
    %p172 = scmp.ne.s32.totalorder %s161, %s162
    %p173 = scmp.eq.s32.totalorder %s17, 0
    %p174 = por %p172, %p173
    %p175 = scmp.ne.s32.totalorder %s161, %s162
    %p176 = scmp.eq.s32.totalorder %s18, 1
    %p177 = por %p175, %p176
    %p179 = scmp.ne.s32.totalorder %s162, %s178
    %p180 = scmp.eq.s32.totalorder %s18, 0
    %p181 = por %p179, %p180
    %p182 = scmp.le.s32.totalorder 1, %s12
    %p183 = scmp.lt.s32.totalorder %s12, 3
    %p184 = pnand %p182, %p183
    %p185 = pneg %p184
    // Predicated region
    $region9: #{model_conv1_forward.2} parent=5 // pred_check
      _
    $region10: #{model_conv1_forward.2} parent=5 // pred_check_branch
      %187 = sbr.rel (%p184) target = $region12
    $region11: #{model_conv1_forward.2} parent=5 // pred_region
      %s188 = ssub.s32 %s12, 1
      // Predicated region
      $region13: #{model_conv1_forward.2} parent=11 // pred_check
        %p189 = pneg %p73
      $region14: #{model_conv1_forward.2} parent=11 // pred_check_branch
        %191 = sbr.rel (%p189) target = $region16
      $region15: #{model_conv1_forward.2} parent=11 // pred_region
        _
      $region16: #{model_conv1_forward.2} parent=11 // pred_fallthru
        _
      // Predicated region
      $region17: #{model_conv1_forward.2} parent=11 // pred_check
        %p192 = pneg %p94
      $region18: #{model_conv1_forward.2} parent=11 // pred_check_branch
        %194 = sbr.rel (%p192) target = $region20
      $region19: #{model_conv1_forward.2} parent=11 // pred_region
        _
      $region20: #{model_conv1_forward.2} parent=11 // pred_fallthru
        _
    $region12: #{model_conv1_forward.2} parent=5 // pred_fallthru
      _
    %p195 = scmp.lt.s32.totalorder %s12, 2
    // Predicated region
    $region21: #{model_conv1_forward.2} parent=5 // pred_check
      %p196 = pneg %p195
    $region22: #{model_conv1_forward.2} parent=5 // pred_check_branch
      %198 = sbr.rel (%p196) target = $region24
    $region23: #{model_conv1_forward.2} parent=5 // pred_region
      // Predicated region
      $region25: #{model_conv1_forward.2} parent=23 // pred_check
        %p199 = pneg %p46
      $region26: #{model_conv1_forward.2} parent=23 // pred_check_branch
        %201 = sbr.rel (%p199) target = $region28
      $region27: #{model_conv1_forward.2} parent=23 // pred_region
        %p202 = scmp.lt.s32.totalorder %s19, 1
        %s203 = scalar_select %p202, %s19, 1
        %p204 = scmp.lt.s32.totalorder %s20, 0
        %s205 = scalar_select %p204, %s20, 0
        %s206 = smul.addr %s205, 2
        %s207 = smul.addr %s203, 2
        %s208 = sadd.s32 %s206, %s207
        %s209 = smul.addr %s208, 4
        %s210 = scalar_lea.vmem %s0, %s209
      $region28: #{model_conv1_forward.2} parent=23 // pred_fallthru
        _
    $region24: #{model_conv1_forward.2} parent=5 // pred_fallthru
      _
    %p211 = scmp.le.s32.totalorder 1, %s12
    %p212 = scmp.lt.s32.totalorder %s12, 3
    %p213 = pnand %p211, %p212
    %p214 = pneg %p213
    // Predicated region
    $region29: #{model_conv1_forward.2} parent=5 // pred_check
      _
    $region30: #{model_conv1_forward.2} parent=5 // pred_check_branch
      %216 = sbr.rel (%p213) target = $region32
    $region31: #{model_conv1_forward.2} parent=5 // pred_region
      %s217 = ssub.s32 %s12, 1
      %p218 = scmp.lt.s32.totalorder %s21, 1
      %s219 = scalar_select %p218, %s21, 1
      %p220 = scmp.lt.s32.totalorder %s22, 0
      %s221 = scalar_select %p220, %s22, 0
      %s222 = smul.addr %s221, 2
      %s223 = smul.addr %s219, 2
      %s224 = sadd.s32 %s222, %s223
      %s225 = smul.addr %s224, 4
      %s226 = scalar_lea.vmem %s0, %s225
      %p227 = pneg %p52
      %p228 = pneg %p49
      %p229 = pneg %p73
      %p230 = pneg %p70
      %p231 = pneg %p94
      %p232 = pneg %p91
      %p233 = pneg %p122
      %p234 = pneg %p119
      %p235 = scmp.lt.s32.totalorder %s21, 1
      %s236 = scalar_select %p235, %s21, 1
      %p237 = scmp.lt.s32.totalorder %s22, 0
      %s238 = scalar_select %p237, %s22, 0
      %s239 = sadd.s32 %s238, %s236
      %s240 = smul.addr %s239, 4
      %s241 = scalar_lea.vmem %s3, %s240
      %p242 = pneg %p148
      %p243 = pneg %p145
      %p244 = scmp.lt.s32.totalorder %s21, 1
      %s245 = scalar_select %p244, %s21, 1
      %s246 = smul.addr %s245, 8
      %s247 = scalar_lea.vmem %s4, %s246
      %p248 = pneg %p174
      %p249 = pneg %p171
      %p250 = scmp.lt.s32.totalorder %s21, 1
      %s251 = scalar_select %p250, %s21, 1
      %s252 = smul.addr %s251, 8
      %s253 = scalar_lea.vmem %s5, %s252
      %p254 = scmp.lt.s32.totalorder %s21, 1
      %s255 = scalar_select %p254, %s21, 1
      %p256 = scmp.lt.s32.totalorder %s22, 0
      %s257 = scalar_select %p256, %s22, 0
      %s258 = smul.addr %s257, 2
      %s259 = smul.addr %s255, 2
      %s260 = sadd.s32 %s258, %s259
      %s261 = smul.addr %s260, 4
      %s262 = scalar_lea.vmem %s0, %s261
      %p263 = scmp.lt.s32.totalorder %s21, 1
      %s264 = scalar_select %p263, %s21, 1
      %p265 = scmp.lt.s32.totalorder %s22, 0
      %s266 = scalar_select %p265, %s22, 0
      %s267 = sadd.s32 %s266, %s264
      %s268 = smul.addr %s267, 4
      %s269 = scalar_lea.vmem %s3, %s268
      %p270 = scmp.lt.s32.totalorder %s21, 1
      %s271 = scalar_select %p270, %s21, 1
      %s272 = smul.addr %s271, 8
      %s273 = scalar_lea.vmem %s4, %s272
      %p274 = scmp.lt.s32.totalorder %s21, 1
      %s275 = scalar_select %p274, %s21, 1
      %s276 = smul.addr %s275, 8
      %s277 = scalar_lea.vmem %s5, %s276
      %v279 = vld [vmem:[%s262] sm:$0xf]
      %280 = vst [vmem:[#allocation2] sm:$0xf] %v279
      %v281 = vld [vmem:[%s262] sm:$0xff]
      %283 = vrot.lane.b32.xlu0 %v281, 127
      %v284 = vpop.permute.xlu0 %283
      %v285 = vrot.slane %v284, 4
      %vm286 = vcmask 1039360
      %v287 = vsel %vm286, %v284, %v285
      %289 = vst [vmem:[#allocation2 + $0x4] sm:$0xf] %v287
      %v290 = vld [vmem:[%s262] sm:$0xff]
      %292 = vrot.lane.b32.xlu0 %v290, 126
      %v293 = vpop.permute.xlu0 %292
      %v294 = vrot.slane %v293, 4
      %vm295 = vcmask 1031168
      %v296 = vsel %vm295, %v293, %v294
      %298 = vst [vmem:[#allocation2 + $0x8] sm:$0xf] %v296
      %v299 = vld [vmem:[%s262] sm:$0xff]
      %301 = vrot.lane.b32.xlu0 %v299, 125
      %v302 = vpop.permute.xlu0 %301
      %v303 = vrot.slane %v302, 4
      %vm304 = vcmask 1022976
      %v305 = vsel %vm304, %v302, %v303
      %307 = vst [vmem:[#allocation2 + $0xc] sm:$0xf] %v305
      %v308 = vld [vmem:[%s262] sm:$0xff]
      %310 = vrot.lane.b32.xlu0 %v308, 124
      %v311 = vpop.permute.xlu0 %310
      %v312 = vrot.slane %v311, 4
      %vm313 = vcmask 1014784
      %v314 = vsel %vm313, %v311, %v312
      %316 = vst [vmem:[#allocation2 + $0x10] sm:$0xf] %v314
      %v317 = vld [vmem:[%s262] sm:$0xff]
      %319 = vrot.lane.b32.xlu0 %v317, 123
      %v320 = vpop.permute.xlu0 %319
      %v321 = vrot.slane %v320, 4
      %vm322 = vcmask 1006592
      %v323 = vsel %vm322, %v320, %v321
      %325 = vst [vmem:[#allocation2 + $0x14] sm:$0xf] %v323
      %v326 = vld [vmem:[%s262] sm:$0xff]
      %328 = vrot.lane.b32.xlu0 %v326, 122
      %v329 = vpop.permute.xlu0 %328
      %v330 = vrot.slane %v329, 4
      %vm331 = vcmask 998400
      %v332 = vsel %vm331, %v329, %v330
      %334 = vst [vmem:[#allocation2 + $0x18] sm:$0xf] %v332
      %v335 = vld [vmem:[%s262] sm:$0xff]
      %337 = vrot.lane.b32.xlu0 %v335, 121
      %v338 = vpop.permute.xlu0 %337
      %v339 = vrot.slane %v338, 4
      %vm340 = vcmask 990208
      %v341 = vsel %vm340, %v338, %v339
      %343 = vst [vmem:[#allocation2 + $0x1c] sm:$0xf] %v341
      %v344 = vld [vmem:[%s262] sm:$0xff]
      %346 = vrot.lane.b32.xlu0 %v344, 120
      %v347 = vpop.permute.xlu0 %346
      %v348 = vrot.slane %v347, 4
      %vm349 = vcmask 982016
      %v350 = vsel %vm349, %v347, %v348
      %352 = vst [vmem:[#allocation2 + $0x20] sm:$0xf] %v350
      %v353 = vld [vmem:[%s262] sm:$0xff]
      %355 = vrot.lane.b32.xlu0 %v353, 119
      %v356 = vpop.permute.xlu0 %355
      %v357 = vrot.slane %v356, 4
      %vm358 = vcmask 973824
      %v359 = vsel %vm358, %v356, %v357
      %361 = vst [vmem:[#allocation2 + $0x24] sm:$0xf] %v359
      %v362 = vld [vmem:[%s262] sm:$0xff]
      %364 = vrot.lane.b32.xlu0 %v362, 118
      %v365 = vpop.permute.xlu0 %364
      %v366 = vrot.slane %v365, 4
      %vm367 = vcmask 965632
      %v368 = vsel %vm367, %v365, %v366
      %370 = vst [vmem:[#allocation2 + $0x28] sm:$0xf] %v368
      %v371 = vld [vmem:[%s262] sm:$0xff]
      %373 = vrot.lane.b32.xlu0 %v371, 117
      %v374 = vpop.permute.xlu0 %373
      %v375 = vrot.slane %v374, 4
      %vm376 = vcmask 957440
      %v377 = vsel %vm376, %v374, %v375
      %379 = vst [vmem:[#allocation2 + $0x2c] sm:$0xf] %v377
      %v380 = vld [vmem:[%s262] sm:$0xff]
      %382 = vrot.lane.b32.xlu0 %v380, 116
      %v383 = vpop.permute.xlu0 %382
      %v384 = vrot.slane %v383, 4
      %vm385 = vcmask 949248
      %v386 = vsel %vm385, %v383, %v384
      %388 = vst [vmem:[#allocation2 + $0x30] sm:$0xf] %v386
      %v389 = vld [vmem:[%s262] sm:$0xff]
      %391 = vrot.lane.b32.xlu0 %v389, 115
      %v392 = vpop.permute.xlu0 %391
      %v393 = vrot.slane %v392, 4
      %vm394 = vcmask 941056
      %v395 = vsel %vm394, %v392, %v393
      %397 = vst [vmem:[#allocation2 + $0x34] sm:$0xf] %v395
      %v398 = vld [vmem:[%s262] sm:$0xff]
      %400 = vrot.lane.b32.xlu0 %v398, 114
      %v401 = vpop.permute.xlu0 %400
      %v402 = vrot.slane %v401, 4
      %vm403 = vcmask 932864
      %v404 = vsel %vm403, %v401, %v402
      %406 = vst [vmem:[#allocation2 + $0x38] sm:$0xf] %v404
      %v407 = vld [vmem:[%s262] sm:$0xff]
      %409 = vrot.lane.b32.xlu0 %v407, 113
      %v410 = vpop.permute.xlu0 %409
      %v411 = vrot.slane %v410, 4
      %vm412 = vcmask 924672
      %v413 = vsel %vm412, %v410, %v411
      %415 = vst [vmem:[#allocation2 + $0x3c] sm:$0xf] %v413
      %v416 = vld [vmem:[%s262] sm:$0xff]
      %418 = vrot.lane.b32.xlu0 %v416, 112
      %v419 = vpop.permute.xlu0 %418
      %v420 = vrot.slane %v419, 4
      %vm421 = vcmask 916480
      %v422 = vsel %vm421, %v419, %v420
      %424 = vst [vmem:[#allocation2 + $0x40] sm:$0xf] %v422
      %v425 = vld [vmem:[%s262] sm:$0xff]
      %427 = vrot.lane.b32.xlu0 %v425, 111
      %v428 = vpop.permute.xlu0 %427
      %v429 = vrot.slane %v428, 4
      %vm430 = vcmask 908288
      %v431 = vsel %vm430, %v428, %v429
      %433 = vst [vmem:[#allocation2 + $0x44] sm:$0xf] %v431
      %v434 = vld [vmem:[%s262] sm:$0xff]
      %436 = vrot.lane.b32.xlu0 %v434, 110
      %v437 = vpop.permute.xlu0 %436
      %v438 = vrot.slane %v437, 4
      %vm439 = vcmask 900096
      %v440 = vsel %vm439, %v437, %v438
      %442 = vst [vmem:[#allocation2 + $0x48] sm:$0xf] %v440
      %v443 = vld [vmem:[%s262] sm:$0xff]
      %445 = vrot.lane.b32.xlu0 %v443, 109
      %v446 = vpop.permute.xlu0 %445
      %v447 = vrot.slane %v446, 4
      %vm448 = vcmask 891904
      %v449 = vsel %vm448, %v446, %v447
      %451 = vst [vmem:[#allocation2 + $0x4c] sm:$0xf] %v449
      %v452 = vld [vmem:[%s262] sm:$0xff]
      %454 = vrot.lane.b32.xlu0 %v452, 108
      %v455 = vpop.permute.xlu0 %454
      %v456 = vrot.slane %v455, 4
      %vm457 = vcmask 883712
      %v458 = vsel %vm457, %v455, %v456
      %460 = vst [vmem:[#allocation2 + $0x50] sm:$0xf] %v458
      %v461 = vld [vmem:[%s262] sm:$0xff]
      %463 = vrot.lane.b32.xlu0 %v461, 107
      %v464 = vpop.permute.xlu0 %463
      %v465 = vrot.slane %v464, 4
      %vm466 = vcmask 875520
      %v467 = vsel %vm466, %v464, %v465
      %469 = vst [vmem:[#allocation2 + $0x54] sm:$0xf] %v467
      %v470 = vld [vmem:[%s262] sm:$0xff]
      %472 = vrot.lane.b32.xlu0 %v470, 106
      %v473 = vpop.permute.xlu0 %472
      %v474 = vrot.slane %v473, 4
      %vm475 = vcmask 867328
      %v476 = vsel %vm475, %v473, %v474
      %478 = vst [vmem:[#allocation2 + $0x58] sm:$0xf] %v476
      %v479 = vld [vmem:[%s262] sm:$0xff]
      %481 = vrot.lane.b32.xlu0 %v479, 105
      %v482 = vpop.permute.xlu0 %481
      %v483 = vrot.slane %v482, 4
      %vm484 = vcmask 859136
      %v485 = vsel %vm484, %v482, %v483
      %487 = vst [vmem:[#allocation2 + $0x5c] sm:$0xf] %v485
      %v488 = vld [vmem:[%s262] sm:$0xff]
      %490 = vrot.lane.b32.xlu0 %v488, 104
      %v491 = vpop.permute.xlu0 %490
      %v492 = vrot.slane %v491, 4
      %vm493 = vcmask 850944
      %v494 = vsel %vm493, %v491, %v492
      %496 = vst [vmem:[#allocation2 + $0x60] sm:$0xf] %v494
      %v497 = vld [vmem:[%s262] sm:$0xff]
      %499 = vrot.lane.b32.xlu0 %v497, 103
      %v500 = vpop.permute.xlu0 %499
      %v501 = vrot.slane %v500, 4
      %vm502 = vcmask 842752
      %v503 = vsel %vm502, %v500, %v501
      %505 = vst [vmem:[#allocation2 + $0x64] sm:$0xf] %v503
      %v506 = vld [vmem:[%s262] sm:$0xff]
      %508 = vrot.lane.b32.xlu0 %v506, 102
      %v509 = vpop.permute.xlu0 %508
      %v510 = vrot.slane %v509, 4
      %vm511 = vcmask 834560
      %v512 = vsel %vm511, %v509, %v510
      %514 = vst [vmem:[#allocation2 + $0x68] sm:$0xf] %v512
      %v515 = vld [vmem:[%s262] sm:$0xff]
      %517 = vrot.lane.b32.xlu0 %v515, 101
      %v518 = vpop.permute.xlu0 %517
      %v519 = vrot.slane %v518, 4
      %vm520 = vcmask 826368
      %v521 = vsel %vm520, %v518, %v519
      %523 = vst [vmem:[#allocation2 + $0x6c] sm:$0xf] %v521
      %v524 = vld [vmem:[%s262] sm:$0xff]
      %526 = vrot.lane.b32.xlu0 %v524, 100
      %v527 = vpop.permute.xlu0 %526
      %v528 = vrot.slane %v527, 4
      %vm529 = vcmask 818176
      %v530 = vsel %vm529, %v527, %v528
      %532 = vst [vmem:[#allocation2 + $0x70] sm:$0xf] %v530
      %v533 = vld [vmem:[%s262] sm:$0xff]
      %535 = vrot.lane.b32.xlu0 %v533, 99
      %v536 = vpop.permute.xlu0 %535
      %v537 = vrot.slane %v536, 4
      %vm538 = vcmask 809984
      %v539 = vsel %vm538, %v536, %v537
      %541 = vst [vmem:[#allocation2 + $0x74] sm:$0xf] %v539
      %v542 = vld [vmem:[%s262] sm:$0xff]
      %544 = vrot.lane.b32.xlu0 %v542, 98
      %v545 = vpop.permute.xlu0 %544
      %v546 = vrot.slane %v545, 4
      %vm547 = vcmask 801792
      %v548 = vsel %vm547, %v545, %v546
      %550 = vst [vmem:[#allocation2 + $0x78] sm:$0xf] %v548
      %v551 = vld [vmem:[%s1] sm:$0xff]
      %v552 = vld [vmem:[#allocation2] sm:$0xf]
      %v553 = vld [vmem:[#allocation2 + $0x4] sm:$0xf]
      %v554 = vld [vmem:[#allocation2 + $0x8] sm:$0xf]
      %v555 = vld [vmem:[#allocation2 + $0xc] sm:$0xf]
      %v556 = vld [vmem:[#allocation2 + $0x10] sm:$0xf]
      %v557 = vld [vmem:[#allocation2 + $0x14] sm:$0xf]
      %v558 = vld [vmem:[#allocation2 + $0x18] sm:$0xf]
      %v559 = vld [vmem:[#allocation2 + $0x1c] sm:$0xf]
      %v560 = vld [vmem:[#allocation2 + $0x20] sm:$0xf]
      %v561 = vld [vmem:[#allocation2 + $0x24] sm:$0xf]
      %v562 = vld [vmem:[#allocation2 + $0x28] sm:$0xf]
      %v563 = vld [vmem:[#allocation2 + $0x2c] sm:$0xf]
      %v564 = vld [vmem:[#allocation2 + $0x30] sm:$0xf]
      %v565 = vld [vmem:[#allocation2 + $0x34] sm:$0xf]
      %v566 = vld [vmem:[#allocation2 + $0x38] sm:$0xf]
      %v567 = vld [vmem:[#allocation2 + $0x3c] sm:$0xf]
      %v568 = vld [vmem:[#allocation2 + $0x40] sm:$0xf]
      %v569 = vld [vmem:[#allocation2 + $0x44] sm:$0xf]
      %v570 = vld [vmem:[#allocation2 + $0x48] sm:$0xf]
      %v571 = vld [vmem:[#allocation2 + $0x4c] sm:$0xf]
      %v572 = vld [vmem:[#allocation2 + $0x50] sm:$0xf]
      %v573 = vld [vmem:[#allocation2 + $0x54] sm:$0xf]
      %v574 = vld [vmem:[#allocation2 + $0x58] sm:$0xf]
      %v575 = vld [vmem:[#allocation2 + $0x5c] sm:$0xf]
      %v576 = vld [vmem:[#allocation2 + $0x60] sm:$0xf]
      %v577 = vld [vmem:[#allocation2 + $0x64] sm:$0xf]
      %v578 = vld [vmem:[#allocation2 + $0x68] sm:$0xf]
      %v579 = vld [vmem:[#allocation2 + $0x6c] sm:$0xf]
      %v580 = vld [vmem:[#allocation2 + $0x70] sm:$0xf]
      %v581 = vld [vmem:[#allocation2 + $0x74] sm:$0xf]
      %v582 = vld [vmem:[#allocation2 + $0x78] sm:$0xf]
      %v583 = vld [vmem:[%s2] sm:$0xff]
      %585 = vset.pattern.permute.xlu0 0
      %586 = vperm.xlu0 %585, %v583
      %v587 = vpop.permute.xlu0 %586
      %v590 = vunpack.c.l.b16 %v551
      %v591 = vunpack.c.h.b16 %v551
      %v592 = vpack.c.b16 %v590, %v590
      %v593 = vpack.c.b16 %v591, %v591
      %v626 = vunpack.c.l.b16 %v552
      %v627 = vunpack.c.l.b16 %v553
      %v628 = vunpack.c.l.b16 %v554
      %v629 = vunpack.c.l.b16 %v555
      %v630 = vunpack.c.l.b16 %v556
      %v631 = vunpack.c.l.b16 %v557
      %v632 = vunpack.c.l.b16 %v558
      %v633 = vunpack.c.l.b16 %v559
      %v634 = vunpack.c.l.b16 %v560
      %v635 = vunpack.c.l.b16 %v561
      %v636 = vunpack.c.l.b16 %v562
      %v637 = vunpack.c.l.b16 %v563
      %v638 = vunpack.c.l.b16 %v564
      %v639 = vunpack.c.l.b16 %v565
      %v640 = vunpack.c.l.b16 %v566
      %v641 = vunpack.c.l.b16 %v567
      %v642 = vunpack.c.l.b16 %v568
      %v643 = vunpack.c.l.b16 %v569
      %v644 = vunpack.c.l.b16 %v570
      %v645 = vunpack.c.l.b16 %v571
      %v646 = vunpack.c.l.b16 %v572
      %v647 = vunpack.c.l.b16 %v573
      %v648 = vunpack.c.l.b16 %v574
      %v649 = vunpack.c.l.b16 %v575
      %v650 = vunpack.c.l.b16 %v576
      %v651 = vunpack.c.l.b16 %v577
      %v652 = vunpack.c.l.b16 %v578
      %v653 = vunpack.c.l.b16 %v579
      %v654 = vunpack.c.l.b16 %v580
      %v655 = vunpack.c.l.b16 %v581
      %v656 = vunpack.c.l.b16 %v582
      %v657 = vpack.c.b16 %v627, %v626
      %v658 = vpack.c.b16 %v629, %v628
      %v659 = vpack.c.b16 %v631, %v630
      %v660 = vpack.c.b16 %v633, %v632
      %v661 = vpack.c.b16 %v635, %v634
      %v662 = vpack.c.b16 %v637, %v636
      %v663 = vpack.c.b16 %v639, %v638
      %v664 = vpack.c.b16 %v641, %v640
      %v665 = vpack.c.b16 %v643, %v642
      %v666 = vpack.c.b16 %v645, %v644
      %v667 = vpack.c.b16 %v647, %v646
      %v668 = vpack.c.b16 %v649, %v648
      %v669 = vpack.c.b16 %v651, %v650
      %v670 = vpack.c.b16 %v653, %v652
      %v671 = vpack.c.b16 %v655, %v654
      %v672 = vpack.c.b16 %v656, %v656
      %vm688 = vcmask 982016
      %v690 = vsel %vm688, %v593, 0
      %vm692 = vcmask 1043456
      %v694 = vsel %vm692, %v672, 0
      %696 = vmatprep.subr.bf16.mxu0 0
      %697 = vmatpush1.bf16.msra.mxu0 %v657
      %698 = vmatprep.subr.bf16.mxu0 0
      %699 = vmatpush1.bf16.msra.mxu0 %v658
      %700 = vmatprep.subr.bf16.mxu0 0
      %701 = vmatpush1.bf16.msra.mxu0 %v659
      %702 = vmatprep.subr.bf16.mxu0 0
      %703 = vmatpush1.bf16.msra.mxu0 %v660
      %704 = vmatprep.subr.bf16.mxu0 0
      %705 = vmatpush1.bf16.msra.mxu0 %v661
      %706 = vmatprep.subr.bf16.mxu0 0
      %707 = vmatpush1.bf16.msra.mxu0 %v662
      %708 = vmatprep.subr.bf16.mxu0 0
      %709 = vmatpush1.bf16.msra.mxu0 %v663
      %710 = vmatprep.subr.bf16.mxu0 0
      %711 = vmatpush1.bf16.msra.mxu0 %v664
      %712 = vmatprep.subr.bf16.mxu0 0
      %713 = vmatpush1.bf16.msra.mxu0 %v665
      %714 = vmatprep.subr.bf16.mxu0 0
      %715 = vmatpush1.bf16.msra.mxu0 %v666
      %716 = vmatprep.subr.bf16.mxu0 0
      %717 = vmatpush1.bf16.msra.mxu0 %v667
      %718 = vmatprep.subr.bf16.mxu0 0
      %719 = vmatpush1.bf16.msra.mxu0 %v668
      %720 = vmatprep.subr.bf16.mxu0 0
      %721 = vmatpush1.bf16.msra.mxu0 %v669
      %722 = vmatprep.subr.bf16.mxu0 0
      %723 = vmatpush1.bf16.msra.mxu0 %v670
      %724 = vmatprep.subr.bf16.mxu0 0
      %725 = vmatpush1.bf16.msra.mxu0 %v671
      %726 = vmatprep.subr.bf16.mxu0 0
      %727 = vmatpush1.bf16.msra.mxu0 %v694
      %728 = vmatprep.mubr.bf16.mxu0 %v690
      %729 = vmatmul.mubr.bf16.gmra.mrb[0].mxu0 %v592
      %v730 = vpop.f32.mrb[0].mxu0
      %v731 = vadd.f32 %v587, %v730
      %v732 = vpop.f32.mrb[0].mxu0
      %v733 = vpop.f32.mrb[0].mxu0
      %v734 = vpop.f32.mrb[0].mxu0
      %735 = vdwg.mxu0
      %v736 = vpack.c.bf16 %v731, %v731
      %737 = vst [vmem:[%s269] sm:$0xf] %v736
      %p738 = scmp.eq.s32.totalorder %s22, 0
      // Predicated region
      $region33: #{model_conv1_forward.2} parent=31 // pred_check
        %p739 = pneg %p738
      $region34: #{model_conv1_forward.2} parent=31 // pred_check_branch
        %741 = sbr.rel (%p739) target = $region36
      $region35: #{model_conv1_forward.2} parent=31 // pred_region
        %vm742 = vcmask 7168
        %743 = vst.msk [vmem:[%s273] sm:$0xff] %vm742, 0.0
        %744 = vst.msk [vmem:[%s277] sm:$0xff] %vm742, 0.0
      $region36: #{model_conv1_forward.2} parent=31 // pred_fallthru
        _
      %s745 = smul.u32 %s22, 128
      %v746 = vlaneseq
      %v747 = vand.u32 %v746, 127
      %v748 = vstv %s745
      %v749 = vadd.s32 %v748, %v747
      %vm750 = vcmp.lt.s32.totalorder %v749, 64
      %v751 = vsel %vm750, 1, 0
      %vm752 = vcmp.eq.s32.totalorder %v751, 1
      %v753 = vsel %vm752, %v731, 0.0
      %v754 = vld [vmem:[%s273] sm:$0xff]
      %755 = vadd.xlane.f32.xlu0 %v753
      %v756 = vpop.xlane.xlu0 %755
      %v757 = vadd.f32 %v754, %v756
      %vm758 = vcmask 7168
      %759 = vst.msk [vmem:[%s273] sm:$0xff] %vm758, %v757
      %v760 = vld [vmem:[%s277] sm:$0xff]
      %v761 = vmul.f32 %v753, %v753
      %762 = vadd.xlane.f32.xlu0 %v761
      %v763 = vpop.xlane.xlu0 %762
      %v764 = vadd.f32 %v760, %v763
      %765 = vst.msk [vmem:[%s277] sm:$0xff] %vm758, %v764
      %p766 = scmp.lt.s32.totalorder %s21, 1
      %s767 = scalar_select %p766, %s21, 1
      %p768 = scmp.lt.s32.totalorder %s22, 0
      %s769 = scalar_select %p768, %s22, 0
      %s770 = sadd.s32 %s769, %s767
      %s771 = smul.addr %s770, 4
      %s772 = scalar_lea.vmem %s3, %s771
      %p773 = scmp.lt.s32.totalorder %s21, 1
      %s774 = scalar_select %p773, %s21, 1
      %s775 = smul.addr %s774, 8
      %s776 = scalar_lea.vmem %s4, %s775
      %p777 = scmp.lt.s32.totalorder %s21, 1
      %s778 = scalar_select %p777, %s21, 1
      %s779 = smul.addr %s778, 8
      %s780 = scalar_lea.vmem %s5, %s779
      // Predicated region
      $region37: #{model_conv1_forward.2} parent=31 // pred_check
        %p781 = pneg %p119
      $region38: #{model_conv1_forward.2} parent=31 // pred_check_branch
        %783 = sbr.rel (%p781) target = $region40
      $region39: #{model_conv1_forward.2} parent=31 // pred_region
        _
      $region40: #{model_conv1_forward.2} parent=31 // pred_fallthru
        _
      // Predicated region
      $region41: #{model_conv1_forward.2} parent=31 // pred_check
        %p784 = pneg %p145
      $region42: #{model_conv1_forward.2} parent=31 // pred_check_branch
        %786 = sbr.rel (%p784) target = $region44
      $region43: #{model_conv1_forward.2} parent=31 // pred_region
        _
      $region44: #{model_conv1_forward.2} parent=31 // pred_fallthru
        _
      // Predicated region
      $region45: #{model_conv1_forward.2} parent=31 // pred_check
        %p787 = pneg %p171
      $region46: #{model_conv1_forward.2} parent=31 // pred_check_branch
        %789 = sbr.rel (%p787) target = $region48
      $region47: #{model_conv1_forward.2} parent=31 // pred_region
        _
      $region48: #{model_conv1_forward.2} parent=31 // pred_fallthru
        _
    $region32: #{model_conv1_forward.2} parent=5 // pred_fallthru
      _
    %p790 = scmp.le.s32.totalorder 2, %s12
    // Predicated region
    $region49: #{model_conv1_forward.2} parent=5 // pred_check
      %p791 = pneg %p790
    $region50: #{model_conv1_forward.2} parent=5 // pred_check_branch
      %793 = sbr.rel (%p791) target = $region52
    $region51: #{model_conv1_forward.2} parent=5 // pred_region
      %s794 = ssub.s32 %s12, 2
      // Predicated region
      $region53: #{model_conv1_forward.2} parent=51 // pred_check
        %p795 = pneg %p125
      $region54: #{model_conv1_forward.2} parent=51 // pred_check_branch
        %797 = sbr.rel (%p795) target = $region56
      $region55: #{model_conv1_forward.2} parent=51 // pred_region
        %p798 = scmp.lt.s32.totalorder %s23, 1
        %s799 = scalar_select %p798, %s23, 1
        %p800 = scmp.lt.s32.totalorder %s24, 0
        %s801 = scalar_select %p800, %s24, 0
        %s802 = sadd.s32 %s801, %s799
        %s803 = smul.addr %s802, 4
        %s804 = scalar_lea.vmem %s3, %s803
      $region56: #{model_conv1_forward.2} parent=51 // pred_fallthru
        _
      // Predicated region
      $region57: #{model_conv1_forward.2} parent=51 // pred_check
        %p805 = pneg %p151
      $region58: #{model_conv1_forward.2} parent=51 // pred_check_branch
        %807 = sbr.rel (%p805) target = $region60
      $region59: #{model_conv1_forward.2} parent=51 // pred_region
        %p808 = scmp.lt.s32.totalorder %s23, 1
        %s809 = scalar_select %p808, %s23, 1
        %s810 = smul.addr %s809, 8
        %s811 = scalar_lea.vmem %s4, %s810
      $region60: #{model_conv1_forward.2} parent=51 // pred_fallthru
        _
      // Predicated region
      $region61: #{model_conv1_forward.2} parent=51 // pred_check
        %p812 = pneg %p177
      $region62: #{model_conv1_forward.2} parent=51 // pred_check_branch
        %814 = sbr.rel (%p812) target = $region64
      $region63: #{model_conv1_forward.2} parent=51 // pred_region
        %p815 = scmp.lt.s32.totalorder %s23, 1
        %s816 = scalar_select %p815, %s23, 1
        %s817 = smul.addr %s816, 8
        %s818 = scalar_lea.vmem %s5, %s817
      $region64: #{model_conv1_forward.2} parent=51 // pred_fallthru
        _
    $region52: #{model_conv1_forward.2} parent=5 // pred_fallthru
      _
  $region6: #{model_conv1_forward.2} parent=0 // loop_footer
    %s16 = sadd.s32 1, %s12
  $region7: #{model_conv1_forward.2} parent=0 // loop_footer_branch
    %11 = sbr.rel target = $region3
  $region8: #{model_conv1_forward.2} parent=0 // loop_exit
    _

</llo_original>
